<compile_context>
chip_gen: v6e
topology: v6e:2x2x1
jax: 0.10.0
libtpu: 0.0.40
codegen_flags: <defaults>
</compile_context>

<pallas_src>
import functools

import jax
import jax.numpy as jnp
from jax import lax
from jax.experimental import pallas as pl
from jax.experimental.pallas import tpu as pltpu


def _lstm_reg_kernel(x_ref, wih0_ref, whh0_ref, b0_ref, w1_ref, b1_ref,
                     wreg_ref, breg_ref, out_ref, g_ref, h1_ref,
                     *, seq_len, b_tile, hidden):
    S, B, H = seq_len, b_tile, hidden
    f32 = jnp.float32
    cdt = wih0_ref.dtype        # MXU compute dtype (f32 or bf16); accum stays f32

    # ---- Phase 1: hoisted layer-0 input projection, all timesteps at once ----
    g_ref[...] = (jnp.dot(x_ref[...], wih0_ref[...],
                          preferred_element_type=f32) + b0_ref[...])

    def row_off(t):
        off = t * B
        # B is always a multiple of 8 -> aligned, unmasked sublane accesses.
        return off if isinstance(t, int) else pl.multiple_of(off, 8)

    def activate(g, c):
        # Gate order [i | f | o | g]: one sigmoid pass over 3H + one tanh over H
        # (plus tanh(c) below) instead of two full-width 4H passes.
        sig = jax.nn.sigmoid(g[:, :3 * H])
        gg = jnp.tanh(g[:, 3 * H:])
        i, f, o = sig[:, :H], sig[:, H:2 * H], sig[:, 2 * H:3 * H]
        c_new = f * c + i * gg
        h_new = o * jnp.tanh(c_new)
        return h_new, c_new

    def l0_step(t, h0, c0):
        # Serial path: one (B,H)@(H,4H) matmul; input projection comes from g_ref.
        # whh0 is streamed from VMEM each step rather than pinned in vregs.
        g = g_ref[pl.ds(row_off(t), B), :] + jnp.dot(
            h0.astype(cdt), whh0_ref[...], preferred_element_type=f32)
        return activate(g, c0)

    def l1_step(t, h0_t, h1, c1):
        # Fused input+hidden projection: [h0_t | h1_{t-1}] @ [wih1 ; whh1].
        lhs = jnp.concatenate([h0_t, h1], axis=1).astype(cdt)
        g = jnp.dot(lhs, w1_ref[...], preferred_element_type=f32) + b1_ref[...]
        h_new, c_new = activate(g, c1)
        h1_ref[pl.ds(row_off(t), B), :] = h_new
        return h_new, c_new

    z = jnp.zeros((B, H), f32)

    # ---- Phases 2-4: skewed, interleaved recurrences ----
    # Prologue: layer-0 step 0 (layer 1 has nothing to consume yet).
    h0, c0 = l0_step(0, z, z)

    def body(t, carry):
        h0, c0, h1, c1 = carry
        # Two independent dependency chains per iteration -> MXU/EUP overlap.
        h1n, c1n = l1_step(t - 1, h0, h1, c1)   # layer-1 step t-1 (uses h0_{t-1})
        h0n, c0n = l0_step(t, h0, c0)           # layer-0 step t
        return (h0n, c0n, h1n, c1n)

    h0, c0, h1, c1 = lax.fori_loop(1, S, body, (h0, c0, z, z),
                                   unroll=min(8, max(S - 1, 1)))

    # Epilogue: final layer-1 step.
    l1_step(S - 1, h0, h1, c1)

    # ---- Phase 5: regression head, one bulk matmul + lane-dense store ----
    out_ref[...] = (jnp.dot(h1_ref[...].astype(cdt), wreg_ref[...],
                            preferred_element_type=f32)
                    + breg_ref[...]).astype(out_ref.dtype)


def lstm_reg_forward(x, params, mxu_dtype=jnp.float32):
    S, B, I = x.shape
    assert S >= 1
    H = params["whh0"].shape[0]
    O = params["wreg"].shape[1]

    SUB, LANE = 8, 128
    # Pad batch to full f32 sublanes.  Throughput scales with *real* batch
    # (per-step matmul latency is flat up to MXU fill), so we do not zero-pad
    # toward 128 rows; large batches are instead tiled across a "parallel"
    # grid axis (sharded over the 2 TensorCores on v7x).
    B_pad = -(-B // SUB) * SUB
    if B_pad > 64:
        b_tile = 64
        B_pad = -(-B_pad // b_tile) * b_tile
    else:
        b_tile = B_pad
    n_tiles = B_pad // b_tile
    O_pad = -(-O // LANE) * LANE        # lane-dense output stores

    def reorder_gates(w):
        # PyTorch gate order [i|f|g|o] -> kernel order [i|f|o|g] so sigmoid and
        # tanh each touch one contiguous block.
        return jnp.concatenate(
            [w[..., :2 * H], w[..., 3 * H:], w[..., 2 * H:3 * H]], axis=-1)

    wih0 = reorder_gates(params["wih0"]).astype(mxu_dtype)
    whh0 = reorder_gates(params["whh0"]).astype(mxu_dtype)
    b0 = reorder_gates(params["b0"]).astype(jnp.float32)
    # Layer 1: stack [wih1 ; whh1] so its two projections fuse into one matmul.
    w1 = jnp.concatenate([reorder_gates(params["wih1"]),
                          reorder_gates(params["whh1"])],
                         axis=0).astype(mxu_dtype)
    b1 = reorder_gates(params["b1"]).astype(jnp.float32)
    wreg = jnp.pad(params["wreg"], ((0, 0), (0, O_pad - O))).astype(mxu_dtype)
    breg = jnp.pad(params["breg"], ((0, 0), (0, O_pad - O))).astype(jnp.float32)

    # Wrapper-side layout plumbing only: (S,B,I) -> (n_tiles, S*b_tile, I),
    # rows within a tile time-major so each step reads one contiguous slab.
    x_p = jnp.pad(x, ((0, 0), (0, B_pad - B), (0, 0)))
    x_p = (x_p.reshape(S, n_tiles, b_tile, I).transpose(1, 0, 2, 3)
           .reshape(n_tiles, S * b_tile, I).astype(mxu_dtype))

    kernel = functools.partial(_lstm_reg_kernel,
                               seq_len=S, b_tile=b_tile, hidden=H)

    # VMEM budget: blocked x/out (double-buffered) + weights + biases + scratch,
    # with headroom, clamped under the physical VMEM of this TPU generation.
    itm = jnp.dtype(mxu_dtype).itemsize
    need = (2 * S * b_tile * I * itm
            + 2 * S * b_tile * O_pad * 4
            + (I * 4 * H + H * 4 * H + 2 * H * 4 * H + H * O_pad) * itm
            + (2 * 4 * H + O_pad) * 4
            + S * b_tile * 4 * H * 4          # gate pre-activation scratch
            + S * b_tile * H * 4)             # layer-1 h history scratch
    try:
        vmem_cap = pltpu.get_tpu_info().vmem_capacity_bytes
    except Exception:
        vmem_cap = 64 * 1024 * 1024
    vmem_limit = int(min(max(2 * need + (4 << 20), 32 << 20),
                         vmem_cap - (8 << 20)))

    full_vmem = pl.BlockSpec(memory_space=pltpu.MemorySpace.VMEM)
    out = pl.pallas_call(
        kernel,
        out_shape=jax.ShapeDtypeStruct((n_tiles, S * b_tile, O_pad), jnp.float32),
        grid=(n_tiles,),
        in_specs=[
            pl.BlockSpec((None, S * b_tile, I), lambda g: (g, 0, 0)),   # x
            full_vmem,   # wih0
            full_vmem,   # whh0
            full_vmem,   # b0
            full_vmem,   # w1 = [wih1 ; whh1]
            full_vmem,   # b1
            full_vmem,   # wreg
            full_vmem,   # breg
        ],
        out_specs=pl.BlockSpec((None, S * b_tile, O_pad), lambda g: (g, 0, 0)),
        scratch_shapes=[
            pltpu.VMEM((S * b_tile, 4 * H), jnp.float32),   # gate pre-activations
            pltpu.VMEM((S * b_tile, H), jnp.float32),       # layer-1 h history
        ],
        compiler_params=pltpu.CompilerParams(
            dimension_semantics=("parallel",),
            vmem_limit_bytes=vmem_limit,
        ),
    )(x_p, wih0, whh0, b0, w1, b1, wreg, breg)

    out = (out.reshape(n_tiles, S, b_tile, O_pad).transpose(1, 0, 2, 3)
           .reshape(S, B_pad, O_pad))
    return out[:, :B, :O]


def init_params(key, input_size, hidden_size, output_size=1):
    """Deterministic init mimicking PyTorch defaults: U(-1/sqrt(H), 1/sqrt(H))."""
    H = hidden_size
    bound = 1.0 / float(jnp.sqrt(jnp.float32(H)))
    keys = jax.random.split(key, 10)

    def u(k_, shape):
        return jax.random.uniform(k_, shape, jnp.float32, -bound, bound)

    # nn.LSTM layer 0 params (shapes as in PyTorch __init__)
    w_ih0 = u(keys[0], (4 * H, input_size))
    w_hh0 = u(keys[1], (4 * H, H))
    b_ih0 = u(keys[2], (4 * H,))
    b_hh0 = u(keys[3], (4 * H,))
    # nn.LSTM layer 1 params (input is layer-0 hidden)
    w_ih1 = u(keys[4], (4 * H, H))
    w_hh1 = u(keys[5], (4 * H, H))
    b_ih1 = u(keys[6], (4 * H,))
    b_hh1 = u(keys[7], (4 * H,))
    # nn.Linear(hidden, output)
    w_reg = u(keys[8], (output_size, H))
    b_reg = u(keys[9], (output_size,))

    return {
        "wih0": w_ih0.T, "whh0": w_hh0.T, "b0": (b_ih0 + b_hh0)[None, :],
        "wih1": w_ih1.T, "whh1": w_hh1.T, "b1": (b_ih1 + b_hh1)[None, :],
        "wreg": w_reg.T, "breg": b_reg[None, :],
    }


def ref_forward(x, p):
    """Pure-JAX reference of lstm_reg.forward (PyTorch gate order)."""
    S, B, _ = x.shape
    H = p["whh0"].shape[0]

    def cell(x_t, h, c, wih, whh, b):
        g = x_t @ wih + h @ whh + b
        i, f, gg, o = jnp.split(g, 4, axis=-1)
        i = jax.nn.sigmoid(i)
        f = jax.nn.sigmoid(f)
        gg = jnp.tanh(gg)
        o = jax.nn.sigmoid(o)
        c = f * c + i * gg
        h = o * jnp.tanh(c)
        return h, c

    def step(carry, x_t):
        h0, c0, h1, c1 = carry
        h0, c0 = cell(x_t, h0, c0, p["wih0"], p["whh0"], p["b0"])
        h1, c1 = cell(h0, h1, c1, p["wih1"], p["whh1"], p["b1"])
        y = h1 @ p["wreg"] + p["breg"]
        return (h0, c0, h1, c1), y

    z = jnp.zeros((B, H), jnp.float32)
    _, ys = lax.scan(step, (z, z, z, z), x)
    return ys


if __name__ == "__main__":
    S, B, I, H, O = 8, 2, 4, 32, 1
    key = jax.random.PRNGKey(0)
    kx, kp = jax.random.split(key)
    x = jax.random.normal(kx, (S, B, I), jnp.float32)
    params = init_params(kp, I, H, O)

    ref = ref_forward(x, params)

    # f32 MXU path: bit-tight comparison against the f32 reference.
    out = jax.block_until_ready(lstm_reg_forward(x, params, mxu_dtype=jnp.float32))
    assert out.shape == (S, B, O), out.shape
    assert jnp.allclose(out, ref, atol=1e-4, rtol=1e-4), "f32 kernel mismatch"

    # bf16 MXU path (v6e/v7x fast path): f32 accumulation + f32 gate math, so
    # only the matmul inputs are rounded; tolerance loosened accordingly.
    out_bf16 = jax.block_until_ready(
        lstm_reg_forward(x, params, mxu_dtype=jnp.bfloat16))
    assert out_bf16.shape == (S, B, O), out_bf16.shape
    assert jnp.allclose(out_bf16, ref, atol=5e-2, rtol=5e-2), "bf16 kernel mismatch"

    print("KERNEL_OK")
</pallas_src>

<mosaic_0001>
module attributes {stable_mosaic.version = 11 : i64} {
  func.func @_lstm_reg_kernel(%arg0: i32, %arg1: memref<1x64x4xf32, #tpu.memory_space<vmem>>, %arg2: memref<4x128xf32, #tpu.memory_space<vmem>>, %arg3: memref<32x128xf32, #tpu.memory_space<vmem>>, %arg4: memref<1x128xf32, #tpu.memory_space<vmem>>, %arg5: memref<64x128xf32, #tpu.memory_space<vmem>>, %arg6: memref<1x128xf32, #tpu.memory_space<vmem>>, %arg7: memref<32x128xf32, #tpu.memory_space<vmem>>, %arg8: memref<1x128xf32, #tpu.memory_space<vmem>>, %arg9: memref<1x64x128xf32, #tpu.memory_space<vmem>>, %arg10: memref<64x128xf32, #tpu.memory_space<vmem>>, %arg11: memref<64x32xf32, #tpu.memory_space<vmem>>) attributes {dimension_semantics = [#tpu.dimension_semantics<parallel>], iteration_bounds = array<i64: 1>, scalar_prefetch = 0 : i64, scratch_operands = 2 : i64, tpu.core_type = #tpu.core_type<tc>, window_params = [{transform_indices = @transform_0, window_bounds = array<i64: 1, 64, 4>}, {pipeline_mode = #tpu.pipeline_mode<synchronous>, transform_indices = @transform_1, window_bounds = array<i64: 4, 128>}, {pipeline_mode = #tpu.pipeline_mode<synchronous>, transform_indices = @transform_2, window_bounds = array<i64: 32, 128>}, {pipeline_mode = #tpu.pipeline_mode<synchronous>, transform_indices = @transform_3, window_bounds = array<i64: 1, 128>}, {pipeline_mode = #tpu.pipeline_mode<synchronous>, transform_indices = @transform_4, window_bounds = array<i64: 64, 128>}, {pipeline_mode = #tpu.pipeline_mode<synchronous>, transform_indices = @transform_5, window_bounds = array<i64: 1, 128>}, {pipeline_mode = #tpu.pipeline_mode<synchronous>, transform_indices = @transform_6, window_bounds = array<i64: 32, 128>}, {pipeline_mode = #tpu.pipeline_mode<synchronous>, transform_indices = @transform_7, window_bounds = array<i64: 1, 128>}, {transform_indices = @transform_8, window_bounds = array<i64: 1, 64, 128>}]} {
    %c0 = arith.constant 0 : index
    %c0_0 = arith.constant 0 : index
    %c0_1 = arith.constant 0 : index
    %0 = vector.load %arg1[%c0, %c0_0, %c0_1] : memref<1x64x4xf32, #tpu.memory_space<vmem>>, vector<1x64x4xf32>
    %1 = vector.shape_cast %0 : vector<1x64x4xf32> to vector<64x4xf32>
    %c0_2 = arith.constant 0 : index
    %c0_3 = arith.constant 0 : index
    %2 = vector.load %arg2[%c0_2, %c0_3] : memref<4x128xf32, #tpu.memory_space<vmem>>, vector<4x128xf32>
    %cst = arith.constant dense<0.000000e+00> : vector<64x128xf32>
    %3 = tpu.matmul %1, %2, %cst {dimension_numbers = #tpu.dot_dimension_numbers<[1], [0], [0], [1], [0, 0, 1, 1], [], []>} : vector<64x4xf32>, vector<4x128xf32>, vector<64x128xf32> -> vector<64x128xf32>
    %c0_4 = arith.constant 0 : index
    %c0_5 = arith.constant 0 : index
    %4 = vector.load %arg4[%c0_4, %c0_5] : memref<1x128xf32, #tpu.memory_space<vmem>>, vector<1x128xf32>
    %5 = vector.broadcast %4 : vector<1x128xf32> to vector<64x128xf32>
    %6 = arith.addf %3, %5 : vector<64x128xf32>
    %c0_6 = arith.constant 0 : index
    %c0_7 = arith.constant 0 : index
    %7 = vector.load %arg10[%c0_6, %c0_7] : memref<64x128xf32, #tpu.memory_space<vmem>>, vector<64x128xf32>
    tpu.vector_store %arg10[%c0_6, %c0_7], %6 {strides = array<i32>} : memref<64x128xf32, #tpu.memory_space<vmem>>, vector<64x128xf32>,
    %cst_8 = arith.constant 0.000000e+00 : f32
    %8 = vector.broadcast %cst_8 : f32 to vector<8x32xf32>
    %c0_9 = arith.constant 0 : index
    %c0_10 = arith.constant 0 : index
    %9 = vector.load %arg10[%c0_9, %c0_10] : memref<64x128xf32, #tpu.memory_space<vmem>>, vector<8x128xf32>
    %c0_11 = arith.constant 0 : index
    %c0_12 = arith.constant 0 : index
    %10 = vector.load %arg3[%c0_11, %c0_12] : memref<32x128xf32, #tpu.memory_space<vmem>>, vector<32x128xf32>
    %cst_13 = arith.constant dense<0.000000e+00> : vector<8x128xf32>
    %11 = tpu.matmul %8, %10, %cst_13 {dimension_numbers = #tpu.dot_dimension_numbers<[1], [0], [0], [1], [0, 0, 1, 1], [], []>} : vector<8x32xf32>, vector<32x128xf32>, vector<8x128xf32> -> vector<8x128xf32>
    %12 = arith.addf %9, %11 : vector<8x128xf32>
    %13 = vector.extract_strided_slice %12 {offsets = [0, 0], sizes = [8, 96], strides = [1, 1]} : vector<8x128xf32> to vector<8x96xf32>
    %14 = arith.negf %13 : vector<8x96xf32>
    %15 = math.exp %14 : vector<8x96xf32>
    %cst_14 = arith.constant 1.000000e+00 : f32
    %16 = vector.broadcast %cst_14 : f32 to vector<8x96xf32>
    %17 = arith.addf %16, %15 : vector<8x96xf32>
    %18 = arith.divf %16, %17 : vector<8x96xf32>
    %19 = vector.extract_strided_slice %12 {offsets = [0, 96], sizes = [8, 32], strides = [1, 1]} : vector<8x128xf32> to vector<8x32xf32>
    %20 = math.tanh %19 : vector<8x32xf32>
    %21 = vector.extract_strided_slice %18 {offsets = [0, 0], sizes = [8, 32], strides = [1, 1]} : vector<8x96xf32> to vector<8x32xf32>
    %22 = vector.extract_strided_slice %18 {offsets = [0, 32], sizes = [8, 32], strides = [1, 1]} : vector<8x96xf32> to vector<8x32xf32>
    %23 = vector.extract_strided_slice %18 {offsets = [0, 64], sizes = [8, 32], strides = [1, 1]} : vector<8x96xf32> to vector<8x32xf32>
    %24 = arith.mulf %22, %8 : vector<8x32xf32>
    %25 = arith.mulf %21, %20 : vector<8x32xf32>
    %26 = arith.addf %24, %25 : vector<8x32xf32>
    %27 = math.tanh %26 : vector<8x32xf32>
    %28 = arith.mulf %23, %27 : vector<8x32xf32>
    %c1_i32 = arith.constant 1 : i32
    %c1_i32_15 = arith.constant 1 : i32
    %29 = arith.subi %c1_i32, %c1_i32_15 : i32
    %30 = tpu.concatenate %28, %8 in 1 : vector<8x32xf32>, vector<8x32xf32> -> vector<8x64xf32>
    %c0_16 = arith.constant 0 : index
    %c0_17 = arith.constant 0 : index
    %31 = vector.load %arg5[%c0_16, %c0_17] : memref<64x128xf32, #tpu.memory_space<vmem>>, vector<64x128xf32>
    %cst_18 = arith.constant dense<0.000000e+00> : vector<8x128xf32>
    %32 = tpu.matmul %30, %31, %cst_18 {dimension_numbers = #tpu.dot_dimension_numbers<[1], [0], [0], [1], [0, 0, 1, 1], [], []>} : vector<8x64xf32>, vector<64x128xf32>, vector<8x128xf32> -> vector<8x128xf32>
    %c0_19 = arith.constant 0 : index
    %c0_20 = arith.constant 0 : index
    %33 = vector.load %arg6[%c0_19, %c0_20] : memref<1x128xf32, #tpu.memory_space<vmem>>, vector<1x128xf32>
    %34 = vector.broadcast %33 : vector<1x128xf32> to vector<8x128xf32>
    %35 = arith.addf %32, %34 : vector<8x128xf32>
    %36 = vector.extract_strided_slice %35 {offsets = [0, 0], sizes = [8, 96], strides = [1, 1]} : vector<8x128xf32> to vector<8x96xf32>
    %37 = arith.negf %36 : vector<8x96xf32>
    %38 = math.exp %37 : vector<8x96xf32>
    %cst_21 = arith.constant 1.000000e+00 : f32
    %39 = vector.broadcast %cst_21 : f32 to vector<8x96xf32>
    %40 = arith.addf %39, %38 : vector<8x96xf32>
    %41 = arith.divf %39, %40 : vector<8x96xf32>
    %42 = vector.extract_strided_slice %35 {offsets = [0, 96], sizes = [8, 32], strides = [1, 1]} : vector<8x128xf32> to vector<8x32xf32>
    %43 = math.tanh %42 : vector<8x32xf32>
    %44 = vector.extract_strided_slice %41 {offsets = [0, 0], sizes = [8, 32], strides = [1, 1]} : vector<8x96xf32> to vector<8x32xf32>
    %45 = vector.extract_strided_slice %41 {offsets = [0, 32], sizes = [8, 32], strides = [1, 1]} : vector<8x96xf32> to vector<8x32xf32>
    %46 = vector.extract_strided_slice %41 {offsets = [0, 64], sizes = [8, 32], strides = [1, 1]} : vector<8x96xf32> to vector<8x32xf32>
    %47 = arith.mulf %45, %8 : vector<8x32xf32>
    %48 = arith.mulf %44, %43 : vector<8x32xf32>
    %49 = arith.addf %47, %48 : vector<8x32xf32>
    %50 = math.tanh %49 : vector<8x32xf32>
    %51 = arith.mulf %46, %50 : vector<8x32xf32>
    %c8_i32 = arith.constant 8 : i32
    %52 = arith.muli %29, %c8_i32 : i32
    %53 = tpu.assume_multiple %52, 8 : i32
    %54 = arith.index_cast %53 : i32 to index
    %c0_22 = arith.constant 0 : index
    %55 = vector.load %arg11[%54, %c0_22] : memref<64x32xf32, #tpu.memory_space<vmem>>, vector<8x32xf32>
    tpu.vector_store %arg11[%54, %c0_22], %51 {strides = array<i32>} : memref<64x32xf32, #tpu.memory_space<vmem>>, vector<8x32xf32>,
    %c8_i32_23 = arith.constant 8 : i32
    %56 = arith.muli %c1_i32, %c8_i32_23 : i32
    %57 = tpu.assume_multiple %56, 8 : i32
    %58 = arith.index_cast %57 : i32 to index
    %c0_24 = arith.constant 0 : index
    %59 = vector.load %arg10[%58, %c0_24] : memref<64x128xf32, #tpu.memory_space<vmem>>, vector<8x128xf32>
    %c0_25 = arith.constant 0 : index
    %c0_26 = arith.constant 0 : index
    %60 = vector.load %arg3[%c0_25, %c0_26] : memref<32x128xf32, #tpu.memory_space<vmem>>, vector<32x128xf32>
    %cst_27 = arith.constant dense<0.000000e+00> : vector<8x128xf32>
    %61 = tpu.matmul %28, %60, %cst_27 {dimension_numbers = #tpu.dot_dimension_numbers<[1], [0], [0], [1], [0, 0, 1, 1], [], []>} : vector<8x32xf32>, vector<32x128xf32>, vector<8x128xf32> -> vector<8x128xf32>
    %62 = arith.addf %59, %61 : vector<8x128xf32>
    %63 = vector.extract_strided_slice %62 {offsets = [0, 0], sizes = [8, 96], strides = [1, 1]} : vector<8x128xf32> to vector<8x96xf32>
    %64 = arith.negf %63 : vector<8x96xf32>
    %65 = math.exp %64 : vector<8x96xf32>
    %cst_28 = arith.constant 1.000000e+00 : f32
    %66 = vector.broadcast %cst_28 : f32 to vector<8x96xf32>
    %67 = arith.addf %66, %65 : vector<8x96xf32>
    %68 = arith.divf %66, %67 : vector<8x96xf32>
    %69 = vector.extract_strided_slice %62 {offsets = [0, 96], sizes = [8, 32], strides = [1, 1]} : vector<8x128xf32> to vector<8x32xf32>
    %70 = math.tanh %69 : vector<8x32xf32>
    %71 = vector.extract_strided_slice %68 {offsets = [0, 0], sizes = [8, 32], strides = [1, 1]} : vector<8x96xf32> to vector<8x32xf32>
    %72 = vector.extract_strided_slice %68 {offsets = [0, 32], sizes = [8, 32], strides = [1, 1]} : vector<8x96xf32> to vector<8x32xf32>
    %73 = vector.extract_strided_slice %68 {offsets = [0, 64], sizes = [8, 32], strides = [1, 1]} : vector<8x96xf32> to vector<8x32xf32>
    %74 = arith.mulf %72, %26 : vector<8x32xf32>
    %75 = arith.mulf %71, %70 : vector<8x32xf32>
    %76 = arith.addf %74, %75 : vector<8x32xf32>
    %77 = math.tanh %76 : vector<8x32xf32>
    %78 = arith.mulf %73, %77 : vector<8x32xf32>
    %c2_i32 = arith.constant 2 : i32
    %c1_i32_29 = arith.constant 1 : i32
    %79 = arith.subi %c2_i32, %c1_i32_29 : i32
    %80 = tpu.concatenate %78, %51 in 1 : vector<8x32xf32>, vector<8x32xf32> -> vector<8x64xf32>
    %c0_30 = arith.constant 0 : index
    %c0_31 = arith.constant 0 : index
    %81 = vector.load %arg5[%c0_30, %c0_31] : memref<64x128xf32, #tpu.memory_space<vmem>>, vector<64x128xf32>
    %cst_32 = arith.constant dense<0.000000e+00> : vector<8x128xf32>
    %82 = tpu.matmul %80, %81, %cst_32 {dimension_numbers = #tpu.dot_dimension_numbers<[1], [0], [0], [1], [0, 0, 1, 1], [], []>} : vector<8x64xf32>, vector<64x128xf32>, vector<8x128xf32> -> vector<8x128xf32>
    %c0_33 = arith.constant 0 : index
    %c0_34 = arith.constant 0 : index
    %83 = vector.load %arg6[%c0_33, %c0_34] : memref<1x128xf32, #tpu.memory_space<vmem>>, vector<1x128xf32>
    %84 = vector.broadcast %83 : vector<1x128xf32> to vector<8x128xf32>
    %85 = arith.addf %82, %84 : vector<8x128xf32>
    %86 = vector.extract_strided_slice %85 {offsets = [0, 0], sizes = [8, 96], strides = [1, 1]} : vector<8x128xf32> to vector<8x96xf32>
    %87 = arith.negf %86 : vector<8x96xf32>
    %88 = math.exp %87 : vector<8x96xf32>
    %cst_35 = arith.constant 1.000000e+00 : f32
    %89 = vector.broadcast %cst_35 : f32 to vector<8x96xf32>
    %90 = arith.addf %89, %88 : vector<8x96xf32>
    %91 = arith.divf %89, %90 : vector<8x96xf32>
    %92 = vector.extract_strided_slice %85 {offsets = [0, 96], sizes = [8, 32], strides = [1, 1]} : vector<8x128xf32> to vector<8x32xf32>
    %93 = math.tanh %92 : vector<8x32xf32>
    %94 = vector.extract_strided_slice %91 {offsets = [0, 0], sizes = [8, 32], strides = [1, 1]} : vector<8x96xf32> to vector<8x32xf32>
    %95 = vector.extract_strided_slice %91 {offsets = [0, 32], sizes = [8, 32], strides = [1, 1]} : vector<8x96xf32> to vector<8x32xf32>
    %96 = vector.extract_strided_slice %91 {offsets = [0, 64], sizes = [8, 32], strides = [1, 1]} : vector<8x96xf32> to vector<8x32xf32>
    %97 = arith.mulf %95, %49 : vector<8x32xf32>
    %98 = arith.mulf %94, %93 : vector<8x32xf32>
    %99 = arith.addf %97, %98 : vector<8x32xf32>
    %100 = math.tanh %99 : vector<8x32xf32>
    %101 = arith.mulf %96, %100 : vector<8x32xf32>
    %c8_i32_36 = arith.constant 8 : i32
    %102 = arith.muli %79, %c8_i32_36 : i32
    %103 = tpu.assume_multiple %102, 8 : i32
    %104 = arith.index_cast %103 : i32 to index
    %c0_37 = arith.constant 0 : index
    %105 = vector.load %arg11[%104, %c0_37] : memref<64x32xf32, #tpu.memory_space<vmem>>, vector<8x32xf32>
    tpu.vector_store %arg11[%104, %c0_37], %101 {strides = array<i32>} : memref<64x32xf32, #tpu.memory_space<vmem>>, vector<8x32xf32>,
    %c8_i32_38 = arith.constant 8 : i32
    %106 = arith.muli %c2_i32, %c8_i32_38 : i32
    %107 = tpu.assume_multiple %106, 8 : i32
    %108 = arith.index_cast %107 : i32 to index
    %c0_39 = arith.constant 0 : index
    %109 = vector.load %arg10[%108, %c0_39] : memref<64x128xf32, #tpu.memory_space<vmem>>, vector<8x128xf32>
    %c0_40 = arith.constant 0 : index
    %c0_41 = arith.constant 0 : index
    %110 = vector.load %arg3[%c0_40, %c0_41] : memref<32x128xf32, #tpu.memory_space<vmem>>, vector<32x128xf32>
    %cst_42 = arith.constant dense<0.000000e+00> : vector<8x128xf32>
    %111 = tpu.matmul %78, %110, %cst_42 {dimension_numbers = #tpu.dot_dimension_numbers<[1], [0], [0], [1], [0, 0, 1, 1], [], []>} : vector<8x32xf32>, vector<32x128xf32>, vector<8x128xf32> -> vector<8x128xf32>
    %112 = arith.addf %109, %111 : vector<8x128xf32>
    %113 = vector.extract_strided_slice %112 {offsets = [0, 0], sizes = [8, 96], strides = [1, 1]} : vector<8x128xf32> to vector<8x96xf32>
    %114 = arith.negf %113 : vector<8x96xf32>
    %115 = math.exp %114 : vector<8x96xf32>
    %cst_43 = arith.constant 1.000000e+00 : f32
    %116 = vector.broadcast %cst_43 : f32 to vector<8x96xf32>
    %117 = arith.addf %116, %115 : vector<8x96xf32>
    %118 = arith.divf %116, %117 : vector<8x96xf32>
    %119 = vector.extract_strided_slice %112 {offsets = [0, 96], sizes = [8, 32], strides = [1, 1]} : vector<8x128xf32> to vector<8x32xf32>
    %120 = math.tanh %119 : vector<8x32xf32>
    %121 = vector.extract_strided_slice %118 {offsets = [0, 0], sizes = [8, 32], strides = [1, 1]} : vector<8x96xf32> to vector<8x32xf32>
    %122 = vector.extract_strided_slice %118 {offsets = [0, 32], sizes = [8, 32], strides = [1, 1]} : vector<8x96xf32> to vector<8x32xf32>
    %123 = vector.extract_strided_slice %118 {offsets = [0, 64], sizes = [8, 32], strides = [1, 1]} : vector<8x96xf32> to vector<8x32xf32>
    %124 = arith.mulf %122, %76 : vector<8x32xf32>
    %125 = arith.mulf %121, %120 : vector<8x32xf32>
    %126 = arith.addf %124, %125 : vector<8x32xf32>
    %127 = math.tanh %126 : vector<8x32xf32>
    %128 = arith.mulf %123, %127 : vector<8x32xf32>
    %c3_i32 = arith.constant 3 : i32
    %c1_i32_44 = arith.constant 1 : i32
    %129 = arith.subi %c3_i32, %c1_i32_44 : i32
    %130 = tpu.concatenate %128, %101 in 1 : vector<8x32xf32>, vector<8x32xf32> -> vector<8x64xf32>
    %c0_45 = arith.constant 0 : index
    %c0_46 = arith.constant 0 : index
    %131 = vector.load %arg5[%c0_45, %c0_46] : memref<64x128xf32, #tpu.memory_space<vmem>>, vector<64x128xf32>
    %cst_47 = arith.constant dense<0.000000e+00> : vector<8x128xf32>
    %132 = tpu.matmul %130, %131, %cst_47 {dimension_numbers = #tpu.dot_dimension_numbers<[1], [0], [0], [1], [0, 0, 1, 1], [], []>} : vector<8x64xf32>, vector<64x128xf32>, vector<8x128xf32> -> vector<8x128xf32>
    %c0_48 = arith.constant 0 : index
    %c0_49 = arith.constant 0 : index
    %133 = vector.load %arg6[%c0_48, %c0_49] : memref<1x128xf32, #tpu.memory_space<vmem>>, vector<1x128xf32>
    %134 = vector.broadcast %133 : vector<1x128xf32> to vector<8x128xf32>
    %135 = arith.addf %132, %134 : vector<8x128xf32>
    %136 = vector.extract_strided_slice %135 {offsets = [0, 0], sizes = [8, 96], strides = [1, 1]} : vector<8x128xf32> to vector<8x96xf32>
    %137 = arith.negf %136 : vector<8x96xf32>
    %138 = math.exp %137 : vector<8x96xf32>
    %cst_50 = arith.constant 1.000000e+00 : f32
    %139 = vector.broadcast %cst_50 : f32 to vector<8x96xf32>
    %140 = arith.addf %139, %138 : vector<8x96xf32>
    %141 = arith.divf %139, %140 : vector<8x96xf32>
    %142 = vector.extract_strided_slice %135 {offsets = [0, 96], sizes = [8, 32], strides = [1, 1]} : vector<8x128xf32> to vector<8x32xf32>
    %143 = math.tanh %142 : vector<8x32xf32>
    %144 = vector.extract_strided_slice %141 {offsets = [0, 0], sizes = [8, 32], strides = [1, 1]} : vector<8x96xf32> to vector<8x32xf32>
    %145 = vector.extract_strided_slice %141 {offsets = [0, 32], sizes = [8, 32], strides = [1, 1]} : vector<8x96xf32> to vector<8x32xf32>
    %146 = vector.extract_strided_slice %141 {offsets = [0, 64], sizes = [8, 32], strides = [1, 1]} : vector<8x96xf32> to vector<8x32xf32>
    %147 = arith.mulf %145, %99 : vector<8x32xf32>
    %148 = arith.mulf %144, %143 : vector<8x32xf32>
    %149 = arith.addf %147, %148 : vector<8x32xf32>
    %150 = math.tanh %149 : vector<8x32xf32>
    %151 = arith.mulf %146, %150 : vector<8x32xf32>
    %c8_i32_51 = arith.constant 8 : i32
    %152 = arith.muli %129, %c8_i32_51 : i32
    %153 = tpu.assume_multiple %152, 8 : i32
    %154 = arith.index_cast %153 : i32 to index
    %c0_52 = arith.constant 0 : index
    %155 = vector.load %arg11[%154, %c0_52] : memref<64x32xf32, #tpu.memory_space<vmem>>, vector<8x32xf32>
    tpu.vector_store %arg11[%154, %c0_52], %151 {strides = array<i32>} : memref<64x32xf32, #tpu.memory_space<vmem>>, vector<8x32xf32>,
    %c8_i32_53 = arith.constant 8 : i32
    %156 = arith.muli %c3_i32, %c8_i32_53 : i32
    %157 = tpu.assume_multiple %156, 8 : i32
    %158 = arith.index_cast %157 : i32 to index
    %c0_54 = arith.constant 0 : index
    %159 = vector.load %arg10[%158, %c0_54] : memref<64x128xf32, #tpu.memory_space<vmem>>, vector<8x128xf32>
    %c0_55 = arith.constant 0 : index
    %c0_56 = arith.constant 0 : index
    %160 = vector.load %arg3[%c0_55, %c0_56] : memref<32x128xf32, #tpu.memory_space<vmem>>, vector<32x128xf32>
    %cst_57 = arith.constant dense<0.000000e+00> : vector<8x128xf32>
    %161 = tpu.matmul %128, %160, %cst_57 {dimension_numbers = #tpu.dot_dimension_numbers<[1], [0], [0], [1], [0, 0, 1, 1], [], []>} : vector<8x32xf32>, vector<32x128xf32>, vector<8x128xf32> -> vector<8x128xf32>
    %162 = arith.addf %159, %161 : vector<8x128xf32>
    %163 = vector.extract_strided_slice %162 {offsets = [0, 0], sizes = [8, 96], strides = [1, 1]} : vector<8x128xf32> to vector<8x96xf32>
    %164 = arith.negf %163 : vector<8x96xf32>
    %165 = math.exp %164 : vector<8x96xf32>
    %cst_58 = arith.constant 1.000000e+00 : f32
    %166 = vector.broadcast %cst_58 : f32 to vector<8x96xf32>
    %167 = arith.addf %166, %165 : vector<8x96xf32>
    %168 = arith.divf %166, %167 : vector<8x96xf32>
    %169 = vector.extract_strided_slice %162 {offsets = [0, 96], sizes = [8, 32], strides = [1, 1]} : vector<8x128xf32> to vector<8x32xf32>
    %170 = math.tanh %169 : vector<8x32xf32>
    %171 = vector.extract_strided_slice %168 {offsets = [0, 0], sizes = [8, 32], strides = [1, 1]} : vector<8x96xf32> to vector<8x32xf32>
    %172 = vector.extract_strided_slice %168 {offsets = [0, 32], sizes = [8, 32], strides = [1, 1]} : vector<8x96xf32> to vector<8x32xf32>
    %173 = vector.extract_strided_slice %168 {offsets = [0, 64], sizes = [8, 32], strides = [1, 1]} : vector<8x96xf32> to vector<8x32xf32>
    %174 = arith.mulf %172, %126 : vector<8x32xf32>
    %175 = arith.mulf %171, %170 : vector<8x32xf32>
    %176 = arith.addf %174, %175 : vector<8x32xf32>
    %177 = math.tanh %176 : vector<8x32xf32>
    %178 = arith.mulf %173, %177 : vector<8x32xf32>
    %c4_i32 = arith.constant 4 : i32
    %c1_i32_59 = arith.constant 1 : i32
    %179 = arith.subi %c4_i32, %c1_i32_59 : i32
    %180 = tpu.concatenate %178, %151 in 1 : vector<8x32xf32>, vector<8x32xf32> -> vector<8x64xf32>
    %c0_60 = arith.constant 0 : index
    %c0_61 = arith.constant 0 : index
    %181 = vector.load %arg5[%c0_60, %c0_61] : memref<64x128xf32, #tpu.memory_space<vmem>>, vector<64x128xf32>
    %cst_62 = arith.constant dense<0.000000e+00> : vector<8x128xf32>
    %182 = tpu.matmul %180, %181, %cst_62 {dimension_numbers = #tpu.dot_dimension_numbers<[1], [0], [0], [1], [0, 0, 1, 1], [], []>} : vector<8x64xf32>, vector<64x128xf32>, vector<8x128xf32> -> vector<8x128xf32>
    %c0_63 = arith.constant 0 : index
    %c0_64 = arith.constant 0 : index
    %183 = vector.load %arg6[%c0_63, %c0_64] : memref<1x128xf32, #tpu.memory_space<vmem>>, vector<1x128xf32>
    %184 = vector.broadcast %183 : vector<1x128xf32> to vector<8x128xf32>
    %185 = arith.addf %182, %184 : vector<8x128xf32>
    %186 = vector.extract_strided_slice %185 {offsets = [0, 0], sizes = [8, 96], strides = [1, 1]} : vector<8x128xf32> to vector<8x96xf32>
    %187 = arith.negf %186 : vector<8x96xf32>
    %188 = math.exp %187 : vector<8x96xf32>
    %cst_65 = arith.constant 1.000000e+00 : f32
    %189 = vector.broadcast %cst_65 : f32 to vector<8x96xf32>
    %190 = arith.addf %189, %188 : vector<8x96xf32>
    %191 = arith.divf %189, %190 : vector<8x96xf32>
    %192 = vector.extract_strided_slice %185 {offsets = [0, 96], sizes = [8, 32], strides = [1, 1]} : vector<8x128xf32> to vector<8x32xf32>
    %193 = math.tanh %192 : vector<8x32xf32>
    %194 = vector.extract_strided_slice %191 {offsets = [0, 0], sizes = [8, 32], strides = [1, 1]} : vector<8x96xf32> to vector<8x32xf32>
    %195 = vector.extract_strided_slice %191 {offsets = [0, 32], sizes = [8, 32], strides = [1, 1]} : vector<8x96xf32> to vector<8x32xf32>
    %196 = vector.extract_strided_slice %191 {offsets = [0, 64], sizes = [8, 32], strides = [1, 1]} : vector<8x96xf32> to vector<8x32xf32>
    %197 = arith.mulf %195, %149 : vector<8x32xf32>
    %198 = arith.mulf %194, %193 : vector<8x32xf32>
    %199 = arith.addf %197, %198 : vector<8x32xf32>
    %200 = math.tanh %199 : vector<8x32xf32>
    %201 = arith.mulf %196, %200 : vector<8x32xf32>
    %c8_i32_66 = arith.constant 8 : i32
    %202 = arith.muli %179, %c8_i32_66 : i32
    %203 = tpu.assume_multiple %202, 8 : i32
    %204 = arith.index_cast %203 : i32 to index
    %c0_67 = arith.constant 0 : index
    %205 = vector.load %arg11[%204, %c0_67] : memref<64x32xf32, #tpu.memory_space<vmem>>, vector<8x32xf32>
    tpu.vector_store %arg11[%204, %c0_67], %201 {strides = array<i32>} : memref<64x32xf32, #tpu.memory_space<vmem>>, vector<8x32xf32>,
    %c8_i32_68 = arith.constant 8 : i32
    %206 = arith.muli %c4_i32, %c8_i32_68 : i32
    %207 = tpu.assume_multiple %206, 8 : i32
    %208 = arith.index_cast %207 : i32 to index
    %c0_69 = arith.constant 0 : index
    %209 = vector.load %arg10[%208, %c0_69] : memref<64x128xf32, #tpu.memory_space<vmem>>, vector<8x128xf32>
    %c0_70 = arith.constant 0 : index
    %c0_71 = arith.constant 0 : index
    %210 = vector.load %arg3[%c0_70, %c0_71] : memref<32x128xf32, #tpu.memory_space<vmem>>, vector<32x128xf32>
    %cst_72 = arith.constant dense<0.000000e+00> : vector<8x128xf32>
    %211 = tpu.matmul %178, %210, %cst_72 {dimension_numbers = #tpu.dot_dimension_numbers<[1], [0], [0], [1], [0, 0, 1, 1], [], []>} : vector<8x32xf32>, vector<32x128xf32>, vector<8x128xf32> -> vector<8x128xf32>
    %212 = arith.addf %209, %211 : vector<8x128xf32>
    %213 = vector.extract_strided_slice %212 {offsets = [0, 0], sizes = [8, 96], strides = [1, 1]} : vector<8x128xf32> to vector<8x96xf32>
    %214 = arith.negf %213 : vector<8x96xf32>
    %215 = math.exp %214 : vector<8x96xf32>
    %cst_73 = arith.constant 1.000000e+00 : f32
    %216 = vector.broadcast %cst_73 : f32 to vector<8x96xf32>
    %217 = arith.addf %216, %215 : vector<8x96xf32>
    %218 = arith.divf %216, %217 : vector<8x96xf32>
    %219 = vector.extract_strided_slice %212 {offsets = [0, 96], sizes = [8, 32], strides = [1, 1]} : vector<8x128xf32> to vector<8x32xf32>
    %220 = math.tanh %219 : vector<8x32xf32>
    %221 = vector.extract_strided_slice %218 {offsets = [0, 0], sizes = [8, 32], strides = [1, 1]} : vector<8x96xf32> to vector<8x32xf32>
    %222 = vector.extract_strided_slice %218 {offsets = [0, 32], sizes = [8, 32], strides = [1, 1]} : vector<8x96xf32> to vector<8x32xf32>
    %223 = vector.extract_strided_slice %218 {offsets = [0, 64], sizes = [8, 32], strides = [1, 1]} : vector<8x96xf32> to vector<8x32xf32>
    %224 = arith.mulf %222, %176 : vector<8x32xf32>
    %225 = arith.mulf %221, %220 : vector<8x32xf32>
    %226 = arith.addf %224, %225 : vector<8x32xf32>
    %227 = math.tanh %226 : vector<8x32xf32>
    %228 = arith.mulf %223, %227 : vector<8x32xf32>
    %c5_i32 = arith.constant 5 : i32
    %c1_i32_74 = arith.constant 1 : i32
    %229 = arith.subi %c5_i32, %c1_i32_74 : i32
    %230 = tpu.concatenate %228, %201 in 1 : vector<8x32xf32>, vector<8x32xf32> -> vector<8x64xf32>
    %c0_75 = arith.constant 0 : index
    %c0_76 = arith.constant 0 : index
    %231 = vector.load %arg5[%c0_75, %c0_76] : memref<64x128xf32, #tpu.memory_space<vmem>>, vector<64x128xf32>
    %cst_77 = arith.constant dense<0.000000e+00> : vector<8x128xf32>
    %232 = tpu.matmul %230, %231, %cst_77 {dimension_numbers = #tpu.dot_dimension_numbers<[1], [0], [0], [1], [0, 0, 1, 1], [], []>} : vector<8x64xf32>, vector<64x128xf32>, vector<8x128xf32> -> vector<8x128xf32>
    %c0_78 = arith.constant 0 : index
    %c0_79 = arith.constant 0 : index
    %233 = vector.load %arg6[%c0_78, %c0_79] : memref<1x128xf32, #tpu.memory_space<vmem>>, vector<1x128xf32>
    %234 = vector.broadcast %233 : vector<1x128xf32> to vector<8x128xf32>
    %235 = arith.addf %232, %234 : vector<8x128xf32>
    %236 = vector.extract_strided_slice %235 {offsets = [0, 0], sizes = [8, 96], strides = [1, 1]} : vector<8x128xf32> to vector<8x96xf32>
    %237 = arith.negf %236 : vector<8x96xf32>
    %238 = math.exp %237 : vector<8x96xf32>
    %cst_80 = arith.constant 1.000000e+00 : f32
    %239 = vector.broadcast %cst_80 : f32 to vector<8x96xf32>
    %240 = arith.addf %239, %238 : vector<8x96xf32>
    %241 = arith.divf %239, %240 : vector<8x96xf32>
    %242 = vector.extract_strided_slice %235 {offsets = [0, 96], sizes = [8, 32], strides = [1, 1]} : vector<8x128xf32> to vector<8x32xf32>
    %243 = math.tanh %242 : vector<8x32xf32>
    %244 = vector.extract_strided_slice %241 {offsets = [0, 0], sizes = [8, 32], strides = [1, 1]} : vector<8x96xf32> to vector<8x32xf32>
    %245 = vector.extract_strided_slice %241 {offsets = [0, 32], sizes = [8, 32], strides = [1, 1]} : vector<8x96xf32> to vector<8x32xf32>
    %246 = vector.extract_strided_slice %241 {offsets = [0, 64], sizes = [8, 32], strides = [1, 1]} : vector<8x96xf32> to vector<8x32xf32>
    %247 = arith.mulf %245, %199 : vector<8x32xf32>
    %248 = arith.mulf %244, %243 : vector<8x32xf32>
    %249 = arith.addf %247, %248 : vector<8x32xf32>
    %250 = math.tanh %249 : vector<8x32xf32>
    %251 = arith.mulf %246, %250 : vector<8x32xf32>
    %c8_i32_81 = arith.constant 8 : i32
    %252 = arith.muli %229, %c8_i32_81 : i32
    %253 = tpu.assume_multiple %252, 8 : i32
    %254 = arith.index_cast %253 : i32 to index
    %c0_82 = arith.constant 0 : index
    %255 = vector.load %arg11[%254, %c0_82] : memref<64x32xf32, #tpu.memory_space<vmem>>, vector<8x32xf32>
    tpu.vector_store %arg11[%254, %c0_82], %251 {strides = array<i32>} : memref<64x32xf32, #tpu.memory_space<vmem>>, vector<8x32xf32>,
    %c8_i32_83 = arith.constant 8 : i32
    %256 = arith.muli %c5_i32, %c8_i32_83 : i32
    %257 = tpu.assume_multiple %256, 8 : i32
    %258 = arith.index_cast %257 : i32 to index
    %c0_84 = arith.constant 0 : index
    %259 = vector.load %arg10[%258, %c0_84] : memref<64x128xf32, #tpu.memory_space<vmem>>, vector<8x128xf32>
    %c0_85 = arith.constant 0 : index
    %c0_86 = arith.constant 0 : index
    %260 = vector.load %arg3[%c0_85, %c0_86] : memref<32x128xf32, #tpu.memory_space<vmem>>, vector<32x128xf32>
    %cst_87 = arith.constant dense<0.000000e+00> : vector<8x128xf32>
    %261 = tpu.matmul %228, %260, %cst_87 {dimension_numbers = #tpu.dot_dimension_numbers<[1], [0], [0], [1], [0, 0, 1, 1], [], []>} : vector<8x32xf32>, vector<32x128xf32>, vector<8x128xf32> -> vector<8x128xf32>
    %262 = arith.addf %259, %261 : vector<8x128xf32>
    %263 = vector.extract_strided_slice %262 {offsets = [0, 0], sizes = [8, 96], strides = [1, 1]} : vector<8x128xf32> to vector<8x96xf32>
    %264 = arith.negf %263 : vector<8x96xf32>
    %265 = math.exp %264 : vector<8x96xf32>
    %cst_88 = arith.constant 1.000000e+00 : f32
    %266 = vector.broadcast %cst_88 : f32 to vector<8x96xf32>
    %267 = arith.addf %266, %265 : vector<8x96xf32>
    %268 = arith.divf %266, %267 : vector<8x96xf32>
    %269 = vector.extract_strided_slice %262 {offsets = [0, 96], sizes = [8, 32], strides = [1, 1]} : vector<8x128xf32> to vector<8x32xf32>
    %270 = math.tanh %269 : vector<8x32xf32>
    %271 = vector.extract_strided_slice %268 {offsets = [0, 0], sizes = [8, 32], strides = [1, 1]} : vector<8x96xf32> to vector<8x32xf32>
    %272 = vector.extract_strided_slice %268 {offsets = [0, 32], sizes = [8, 32], strides = [1, 1]} : vector<8x96xf32> to vector<8x32xf32>
    %273 = vector.extract_strided_slice %268 {offsets = [0, 64], sizes = [8, 32], strides = [1, 1]} : vector<8x96xf32> to vector<8x32xf32>
    %274 = arith.mulf %272, %226 : vector<8x32xf32>
    %275 = arith.mulf %271, %270 : vector<8x32xf32>
    %276 = arith.addf %274, %275 : vector<8x32xf32>
    %277 = math.tanh %276 : vector<8x32xf32>
    %278 = arith.mulf %273, %277 : vector<8x32xf32>
    %c6_i32 = arith.constant 6 : i32
    %c1_i32_89 = arith.constant 1 : i32
    %279 = arith.subi %c6_i32, %c1_i32_89 : i32
    %280 = tpu.concatenate %278, %251 in 1 : vector<8x32xf32>, vector<8x32xf32> -> vector<8x64xf32>
    %c0_90 = arith.constant 0 : index
    %c0_91 = arith.constant 0 : index
    %281 = vector.load %arg5[%c0_90, %c0_91] : memref<64x128xf32, #tpu.memory_space<vmem>>, vector<64x128xf32>
    %cst_92 = arith.constant dense<0.000000e+00> : vector<8x128xf32>
    %282 = tpu.matmul %280, %281, %cst_92 {dimension_numbers = #tpu.dot_dimension_numbers<[1], [0], [0], [1], [0, 0, 1, 1], [], []>} : vector<8x64xf32>, vector<64x128xf32>, vector<8x128xf32> -> vector<8x128xf32>
    %c0_93 = arith.constant 0 : index
    %c0_94 = arith.constant 0 : index
    %283 = vector.load %arg6[%c0_93, %c0_94] : memref<1x128xf32, #tpu.memory_space<vmem>>, vector<1x128xf32>
    %284 = vector.broadcast %283 : vector<1x128xf32> to vector<8x128xf32>
    %285 = arith.addf %282, %284 : vector<8x128xf32>
    %286 = vector.extract_strided_slice %285 {offsets = [0, 0], sizes = [8, 96], strides = [1, 1]} : vector<8x128xf32> to vector<8x96xf32>
    %287 = arith.negf %286 : vector<8x96xf32>
    %288 = math.exp %287 : vector<8x96xf32>
    %cst_95 = arith.constant 1.000000e+00 : f32
    %289 = vector.broadcast %cst_95 : f32 to vector<8x96xf32>
    %290 = arith.addf %289, %288 : vector<8x96xf32>
    %291 = arith.divf %289, %290 : vector<8x96xf32>
    %292 = vector.extract_strided_slice %285 {offsets = [0, 96], sizes = [8, 32], strides = [1, 1]} : vector<8x128xf32> to vector<8x32xf32>
    %293 = math.tanh %292 : vector<8x32xf32>
    %294 = vector.extract_strided_slice %291 {offsets = [0, 0], sizes = [8, 32], strides = [1, 1]} : vector<8x96xf32> to vector<8x32xf32>
    %295 = vector.extract_strided_slice %291 {offsets = [0, 32], sizes = [8, 32], strides = [1, 1]} : vector<8x96xf32> to vector<8x32xf32>
    %296 = vector.extract_strided_slice %291 {offsets = [0, 64], sizes = [8, 32], strides = [1, 1]} : vector<8x96xf32> to vector<8x32xf32>
    %297 = arith.mulf %295, %249 : vector<8x32xf32>
    %298 = arith.mulf %294, %293 : vector<8x32xf32>
    %299 = arith.addf %297, %298 : vector<8x32xf32>
    %300 = math.tanh %299 : vector<8x32xf32>
    %301 = arith.mulf %296, %300 : vector<8x32xf32>
    %c8_i32_96 = arith.constant 8 : i32
    %302 = arith.muli %279, %c8_i32_96 : i32
    %303 = tpu.assume_multiple %302, 8 : i32
    %304 = arith.index_cast %303 : i32 to index
    %c0_97 = arith.constant 0 : index
    %305 = vector.load %arg11[%304, %c0_97] : memref<64x32xf32, #tpu.memory_space<vmem>>, vector<8x32xf32>
    tpu.vector_store %arg11[%304, %c0_97], %301 {strides = array<i32>} : memref<64x32xf32, #tpu.memory_space<vmem>>, vector<8x32xf32>,
    %c8_i32_98 = arith.constant 8 : i32
    %306 = arith.muli %c6_i32, %c8_i32_98 : i32
    %307 = tpu.assume_multiple %306, 8 : i32
    %308 = arith.index_cast %307 : i32 to index
    %c0_99 = arith.constant 0 : index
    %309 = vector.load %arg10[%308, %c0_99] : memref<64x128xf32, #tpu.memory_space<vmem>>, vector<8x128xf32>
    %c0_100 = arith.constant 0 : index
    %c0_101 = arith.constant 0 : index
    %310 = vector.load %arg3[%c0_100, %c0_101] : memref<32x128xf32, #tpu.memory_space<vmem>>, vector<32x128xf32>
    %cst_102 = arith.constant dense<0.000000e+00> : vector<8x128xf32>
    %311 = tpu.matmul %278, %310, %cst_102 {dimension_numbers = #tpu.dot_dimension_numbers<[1], [0], [0], [1], [0, 0, 1, 1], [], []>} : vector<8x32xf32>, vector<32x128xf32>, vector<8x128xf32> -> vector<8x128xf32>
    %312 = arith.addf %309, %311 : vector<8x128xf32>
    %313 = vector.extract_strided_slice %312 {offsets = [0, 0], sizes = [8, 96], strides = [1, 1]} : vector<8x128xf32> to vector<8x96xf32>
    %314 = arith.negf %313 : vector<8x96xf32>
    %315 = math.exp %314 : vector<8x96xf32>
    %cst_103 = arith.constant 1.000000e+00 : f32
    %316 = vector.broadcast %cst_103 : f32 to vector<8x96xf32>
    %317 = arith.addf %316, %315 : vector<8x96xf32>
    %318 = arith.divf %316, %317 : vector<8x96xf32>
    %319 = vector.extract_strided_slice %312 {offsets = [0, 96], sizes = [8, 32], strides = [1, 1]} : vector<8x128xf32> to vector<8x32xf32>
    %320 = math.tanh %319 : vector<8x32xf32>
    %321 = vector.extract_strided_slice %318 {offsets = [0, 0], sizes = [8, 32], strides = [1, 1]} : vector<8x96xf32> to vector<8x32xf32>
    %322 = vector.extract_strided_slice %318 {offsets = [0, 32], sizes = [8, 32], strides = [1, 1]} : vector<8x96xf32> to vector<8x32xf32>
    %323 = vector.extract_strided_slice %318 {offsets = [0, 64], sizes = [8, 32], strides = [1, 1]} : vector<8x96xf32> to vector<8x32xf32>
    %324 = arith.mulf %322, %276 : vector<8x32xf32>
    %325 = arith.mulf %321, %320 : vector<8x32xf32>
    %326 = arith.addf %324, %325 : vector<8x32xf32>
    %327 = math.tanh %326 : vector<8x32xf32>
    %328 = arith.mulf %323, %327 : vector<8x32xf32>
    %c7_i32 = arith.constant 7 : i32
    %c1_i32_104 = arith.constant 1 : i32
    %329 = arith.subi %c7_i32, %c1_i32_104 : i32
    %330 = tpu.concatenate %328, %301 in 1 : vector<8x32xf32>, vector<8x32xf32> -> vector<8x64xf32>
    %c0_105 = arith.constant 0 : index
    %c0_106 = arith.constant 0 : index
    %331 = vector.load %arg5[%c0_105, %c0_106] : memref<64x128xf32, #tpu.memory_space<vmem>>, vector<64x128xf32>
    %cst_107 = arith.constant dense<0.000000e+00> : vector<8x128xf32>
    %332 = tpu.matmul %330, %331, %cst_107 {dimension_numbers = #tpu.dot_dimension_numbers<[1], [0], [0], [1], [0, 0, 1, 1], [], []>} : vector<8x64xf32>, vector<64x128xf32>, vector<8x128xf32> -> vector<8x128xf32>
    %c0_108 = arith.constant 0 : index
    %c0_109 = arith.constant 0 : index
    %333 = vector.load %arg6[%c0_108, %c0_109] : memref<1x128xf32, #tpu.memory_space<vmem>>, vector<1x128xf32>
    %334 = vector.broadcast %333 : vector<1x128xf32> to vector<8x128xf32>
    %335 = arith.addf %332, %334 : vector<8x128xf32>
    %336 = vector.extract_strided_slice %335 {offsets = [0, 0], sizes = [8, 96], strides = [1, 1]} : vector<8x128xf32> to vector<8x96xf32>
    %337 = arith.negf %336 : vector<8x96xf32>
    %338 = math.exp %337 : vector<8x96xf32>
    %cst_110 = arith.constant 1.000000e+00 : f32
    %339 = vector.broadcast %cst_110 : f32 to vector<8x96xf32>
    %340 = arith.addf %339, %338 : vector<8x96xf32>
    %341 = arith.divf %339, %340 : vector<8x96xf32>
    %342 = vector.extract_strided_slice %335 {offsets = [0, 96], sizes = [8, 32], strides = [1, 1]} : vector<8x128xf32> to vector<8x32xf32>
    %343 = math.tanh %342 : vector<8x32xf32>
    %344 = vector.extract_strided_slice %341 {offsets = [0, 0], sizes = [8, 32], strides = [1, 1]} : vector<8x96xf32> to vector<8x32xf32>
    %345 = vector.extract_strided_slice %341 {offsets = [0, 32], sizes = [8, 32], strides = [1, 1]} : vector<8x96xf32> to vector<8x32xf32>
    %346 = vector.extract_strided_slice %341 {offsets = [0, 64], sizes = [8, 32], strides = [1, 1]} : vector<8x96xf32> to vector<8x32xf32>
    %347 = arith.mulf %345, %299 : vector<8x32xf32>
    %348 = arith.mulf %344, %343 : vector<8x32xf32>
    %349 = arith.addf %347, %348 : vector<8x32xf32>
    %350 = math.tanh %349 : vector<8x32xf32>
    %351 = arith.mulf %346, %350 : vector<8x32xf32>
    %c8_i32_111 = arith.constant 8 : i32
    %352 = arith.muli %329, %c8_i32_111 : i32
    %353 = tpu.assume_multiple %352, 8 : i32
    %354 = arith.index_cast %353 : i32 to index
    %c0_112 = arith.constant 0 : index
    %355 = vector.load %arg11[%354, %c0_112] : memref<64x32xf32, #tpu.memory_space<vmem>>, vector<8x32xf32>
    tpu.vector_store %arg11[%354, %c0_112], %351 {strides = array<i32>} : memref<64x32xf32, #tpu.memory_space<vmem>>, vector<8x32xf32>,
    %c8_i32_113 = arith.constant 8 : i32
    %356 = arith.muli %c7_i32, %c8_i32_113 : i32
    %357 = tpu.assume_multiple %356, 8 : i32
    %358 = arith.index_cast %357 : i32 to index
    %c0_114 = arith.constant 0 : index
    %359 = vector.load %arg10[%358, %c0_114] : memref<64x128xf32, #tpu.memory_space<vmem>>, vector<8x128xf32>
    %c0_115 = arith.constant 0 : index
    %c0_116 = arith.constant 0 : index
    %360 = vector.load %arg3[%c0_115, %c0_116] : memref<32x128xf32, #tpu.memory_space<vmem>>, vector<32x128xf32>
    %cst_117 = arith.constant dense<0.000000e+00> : vector<8x128xf32>
    %361 = tpu.matmul %328, %360, %cst_117 {dimension_numbers = #tpu.dot_dimension_numbers<[1], [0], [0], [1], [0, 0, 1, 1], [], []>} : vector<8x32xf32>, vector<32x128xf32>, vector<8x128xf32> -> vector<8x128xf32>
    %362 = arith.addf %359, %361 : vector<8x128xf32>
    %363 = vector.extract_strided_slice %362 {offsets = [0, 0], sizes = [8, 96], strides = [1, 1]} : vector<8x128xf32> to vector<8x96xf32>
    %364 = arith.negf %363 : vector<8x96xf32>
    %365 = math.exp %364 : vector<8x96xf32>
    %cst_118 = arith.constant 1.000000e+00 : f32
    %366 = vector.broadcast %cst_118 : f32 to vector<8x96xf32>
    %367 = arith.addf %366, %365 : vector<8x96xf32>
    %368 = arith.divf %366, %367 : vector<8x96xf32>
    %369 = vector.extract_strided_slice %362 {offsets = [0, 96], sizes = [8, 32], strides = [1, 1]} : vector<8x128xf32> to vector<8x32xf32>
    %370 = math.tanh %369 : vector<8x32xf32>
    %371 = vector.extract_strided_slice %368 {offsets = [0, 0], sizes = [8, 32], strides = [1, 1]} : vector<8x96xf32> to vector<8x32xf32>
    %372 = vector.extract_strided_slice %368 {offsets = [0, 32], sizes = [8, 32], strides = [1, 1]} : vector<8x96xf32> to vector<8x32xf32>
    %373 = vector.extract_strided_slice %368 {offsets = [0, 64], sizes = [8, 32], strides = [1, 1]} : vector<8x96xf32> to vector<8x32xf32>
    %374 = arith.mulf %372, %326 : vector<8x32xf32>
    %375 = arith.mulf %371, %370 : vector<8x32xf32>
    %376 = arith.addf %374, %375 : vector<8x32xf32>
    %377 = math.tanh %376 : vector<8x32xf32>
    %378 = arith.mulf %373, %377 : vector<8x32xf32>
    %c7_i32_119 = arith.constant 7 : i32
    %379 = tpu.concatenate %378, %351 in 1 : vector<8x32xf32>, vector<8x32xf32> -> vector<8x64xf32>
    %c0_120 = arith.constant 0 : index
    %c0_121 = arith.constant 0 : index
    %380 = vector.load %arg5[%c0_120, %c0_121] : memref<64x128xf32, #tpu.memory_space<vmem>>, vector<64x128xf32>
    %cst_122 = arith.constant dense<0.000000e+00> : vector<8x128xf32>
    %381 = tpu.matmul %379, %380, %cst_122 {dimension_numbers = #tpu.dot_dimension_numbers<[1], [0], [0], [1], [0, 0, 1, 1], [], []>} : vector<8x64xf32>, vector<64x128xf32>, vector<8x128xf32> -> vector<8x128xf32>
    %c0_123 = arith.constant 0 : index
    %c0_124 = arith.constant 0 : index
    %382 = vector.load %arg6[%c0_123, %c0_124] : memref<1x128xf32, #tpu.memory_space<vmem>>, vector<1x128xf32>
    %383 = vector.broadcast %382 : vector<1x128xf32> to vector<8x128xf32>
    %384 = arith.addf %381, %383 : vector<8x128xf32>
    %385 = vector.extract_strided_slice %384 {offsets = [0, 0], sizes = [8, 96], strides = [1, 1]} : vector<8x128xf32> to vector<8x96xf32>
    %386 = arith.negf %385 : vector<8x96xf32>
    %387 = math.exp %386 : vector<8x96xf32>
    %cst_125 = arith.constant 1.000000e+00 : f32
    %388 = vector.broadcast %cst_125 : f32 to vector<8x96xf32>
    %389 = arith.addf %388, %387 : vector<8x96xf32>
    %390 = arith.divf %388, %389 : vector<8x96xf32>
    %391 = vector.extract_strided_slice %384 {offsets = [0, 96], sizes = [8, 32], strides = [1, 1]} : vector<8x128xf32> to vector<8x32xf32>
    %392 = math.tanh %391 : vector<8x32xf32>
    %393 = vector.extract_strided_slice %390 {offsets = [0, 0], sizes = [8, 32], strides = [1, 1]} : vector<8x96xf32> to vector<8x32xf32>
    %394 = vector.extract_strided_slice %390 {offsets = [0, 32], sizes = [8, 32], strides = [1, 1]} : vector<8x96xf32> to vector<8x32xf32>
    %395 = vector.extract_strided_slice %390 {offsets = [0, 64], sizes = [8, 32], strides = [1, 1]} : vector<8x96xf32> to vector<8x32xf32>
    %396 = arith.mulf %394, %349 : vector<8x32xf32>
    %397 = arith.mulf %393, %392 : vector<8x32xf32>
    %398 = arith.addf %396, %397 : vector<8x32xf32>
    %399 = math.tanh %398 : vector<8x32xf32>
    %400 = arith.mulf %395, %399 : vector<8x32xf32>
    %c56 = arith.constant 56 : index
    %c0_126 = arith.constant 0 : index
    %401 = vector.load %arg11[%c56, %c0_126] : memref<64x32xf32, #tpu.memory_space<vmem>>, vector<8x32xf32>
    tpu.vector_store %arg11[%c56, %c0_126], %400 {strides = array<i32>} : memref<64x32xf32, #tpu.memory_space<vmem>>, vector<8x32xf32>,
    %c0_127 = arith.constant 0 : index
    %c0_128 = arith.constant 0 : index
    %402 = vector.load %arg11[%c0_127, %c0_128] : memref<64x32xf32, #tpu.memory_space<vmem>>, vector<64x32xf32>
    %c0_129 = arith.constant 0 : index
    %c0_130 = arith.constant 0 : index
    %403 = vector.load %arg7[%c0_129, %c0_130] : memref<32x128xf32, #tpu.memory_space<vmem>>, vector<32x128xf32>
    %cst_131 = arith.constant dense<0.000000e+00> : vector<64x128xf32>
    %404 = tpu.matmul %402, %403, %cst_131 {dimension_numbers = #tpu.dot_dimension_numbers<[1], [0], [0], [1], [0, 0, 1, 1], [], []>} : vector<64x32xf32>, vector<32x128xf32>, vector<64x128xf32> -> vector<64x128xf32>
    %c0_132 = arith.constant 0 : index
    %c0_133 = arith.constant 0 : index
    %405 = vector.load %arg8[%c0_132, %c0_133] : memref<1x128xf32, #tpu.memory_space<vmem>>, vector<1x128xf32>
    %406 = vector.broadcast %405 : vector<1x128xf32> to vector<64x128xf32>
    %407 = arith.addf %404, %406 : vector<64x128xf32>
    %c0_134 = arith.constant 0 : index
    %c0_135 = arith.constant 0 : index
    %c0_136 = arith.constant 0 : index
    %408 = vector.load %arg9[%c0_134, %c0_135, %c0_136] : memref<1x64x128xf32, #tpu.memory_space<vmem>>, vector<1x64x128xf32>
    %409 = vector.shape_cast %408 : vector<1x64x128xf32> to vector<64x128xf32>
    %410 = vector.shape_cast %407 : vector<64x128xf32> to vector<1x64x128xf32>
    tpu.vector_store %arg9[%c0_134, %c0_135, %c0_136], %410 {strides = array<i32>} : memref<1x64x128xf32, #tpu.memory_space<vmem>>, vector<1x64x128xf32>,
    return
  }
  func.func @transform_0(%arg0: i32) -> (i32, i32, i32) {
    %c0_i32 = arith.constant 0 : i32
    %c0_i32_0 = arith.constant 0 : i32
    %c0_i32_1 = arith.constant 0 : i32
    return %arg0, %c0_i32, %c0_i32_0 : i32, i32, i32
  }
  func.func @transform_1(%arg0: i32) -> (i32, i32) {
    %c0_i32 = arith.constant 0 : i32
    %c0_i32_0 = arith.constant 0 : i32
    %c0_i32_1 = arith.constant 0 : i32
    return %c0_i32, %c0_i32_0 : i32, i32
  }
  func.func @transform_2(%arg0: i32) -> (i32, i32) {
    %c0_i32 = arith.constant 0 : i32
    %c0_i32_0 = arith.constant 0 : i32
    %c0_i32_1 = arith.constant 0 : i32
    return %c0_i32, %c0_i32_0 : i32, i32
  }
  func.func @transform_3(%arg0: i32) -> (i32, i32) {
    %c0_i32 = arith.constant 0 : i32
    %c0_i32_0 = arith.constant 0 : i32
    %c0_i32_1 = arith.constant 0 : i32
    return %c0_i32, %c0_i32_0 : i32, i32
  }
  func.func @transform_4(%arg0: i32) -> (i32, i32) {
    %c0_i32 = arith.constant 0 : i32
    %c0_i32_0 = arith.constant 0 : i32
    %c0_i32_1 = arith.constant 0 : i32
    return %c0_i32, %c0_i32_0 : i32, i32
  }
  func.func @transform_5(%arg0: i32) -> (i32, i32) {
    %c0_i32 = arith.constant 0 : i32
    %c0_i32_0 = arith.constant 0 : i32
    %c0_i32_1 = arith.constant 0 : i32
    return %c0_i32, %c0_i32_0 : i32, i32
  }
  func.func @transform_6(%arg0: i32) -> (i32, i32) {
    %c0_i32 = arith.constant 0 : i32
    %c0_i32_0 = arith.constant 0 : i32
    %c0_i32_1 = arith.constant 0 : i32
    return %c0_i32, %c0_i32_0 : i32, i32
  }
  func.func @transform_7(%arg0: i32) -> (i32, i32) {
    %c0_i32 = arith.constant 0 : i32
    %c0_i32_0 = arith.constant 0 : i32
    %c0_i32_1 = arith.constant 0 : i32
    return %c0_i32, %c0_i32_0 : i32, i32
  }
  func.func @transform_8(%arg0: i32) -> (i32, i32, i32) {
    %c0_i32 = arith.constant 0 : i32
    %c0_i32_0 = arith.constant 0 : i32
    %c0_i32_1 = arith.constant 0 : i32
    return %arg0, %c0_i32, %c0_i32_0 : i32, i32, i32
  }
}

</mosaic_0001>

<llo_original>
// kernel: tpu_custom_call.1
$region0: #{tpu_custom_call.1}
  #allocation0 [shape = 'u32[]', space=smem, size = 0x4, offset = 0x4, fixed_abs, tag = 'smem constant byte address 0x4 - core index']
  #allocation1 [shape = 'u32[144,128]{1,0:T(1,128)}', space=vmem, size = 0x12000, scoped, tag = 'internal scratch']
  #allocation2 [shape = 'f32[64,128]{1,0:T(8,128)}', space=vmem, size = 0x8000, scoped, tag = 'scratch operand']
  #allocation3 [shape = 'f32[64,32]{1,0:T(8,128)}', space=vmem, size = 0x8000, scoped, tag = 'scratch operand']
  %s0 = inlined_call_operand.vmem [shape: f32[1,64,4], index: 0, kind: input, shape index: {}]
  %s1 = inlined_call_operand.vmem [shape: f32[4,128], index: 1, kind: input, shape index: {}]
  %s2 = inlined_call_operand.hbm [shape: f32[32,128], index: 2, kind: input, shape index: {}]
  %s3 = inlined_call_operand.vmem [shape: f32[1,128], index: 3, kind: input, shape index: {}]
  %s4 = inlined_call_operand.vmem [shape: f32[64,128], index: 4, kind: input, shape index: {}]
  %s5 = inlined_call_operand.vmem [shape: f32[1,128], index: 5, kind: input, shape index: {}]
  %s6 = inlined_call_operand.hbm [shape: f32[32,128], index: 6, kind: input, shape index: {}]
  %s7 = inlined_call_operand.vmem [shape: f32[1,128], index: 7, kind: input, shape index: {}]
  %s8 = inlined_call_operand.hbm [shape: f32[1,64,128], index: 8, kind: output, shape index: {}]
  %s9 = sld [smem:[#allocation0]]
  $region50: #{tpu_custom_call.1} parent=0
    _
  %s11 = ssub.s32 1, %s9
  %s12 = scalar_select 0, %s11, %s9
  $region1: #{tpu_custom_call.1} parent=0
    #allocation4 [shape = 'u8[16384]{0}', space=vmem, size = 0x4000, scoped, tag = 'input window, operand 2, single buffered']
    #allocation5 [shape = 's32[1]{0}', space=sflag, size = 0x4, scoped, tag = 'scoped memory for tpu_custom_call.1']
    #allocation6 [shape = 's32[1]{0}', space=sflag, size = 0x4, scoped, tag = 'scoped memory for tpu_custom_call.1']
    #allocation7 [shape = 'u8[16384]{0}', space=vmem, size = 0x4000, scoped, tag = 'input window, operand 6, single buffered']
    #allocation8 [shape = 's32[1]{0}', space=sflag, size = 0x4, scoped, tag = 'scoped memory for tpu_custom_call.1']
    #allocation9 [shape = 'u8[32768]{0}', space=vmem, size = 0x8000, scoped, tag = 'output window, operand 0, single buffered']
    %13 = vsyncpa [#allocation5], 0
    %14 = vsyncpa [#allocation8], 0
    %15 = vsyncpa [#allocation6], 0
    // Predicated region
    $region2: #{tpu_custom_call.1} parent=1 // pred_check
      _
    $region3: #{tpu_custom_call.1} parent=1 // pred_check_branch
      %17 = sbr.rel (0) target = $region5
    $region4: #{tpu_custom_call.1} parent=1 // pred_region
      _
    $region5: #{tpu_custom_call.1} parent=1 // pred_fallthru
      _
    // Predicated region
    $region6: #{tpu_custom_call.1} parent=1 // pred_check
      _
    $region7: #{tpu_custom_call.1} parent=1 // pred_check_branch
      %19 = sbr.rel (0) target = $region9
    $region8: #{tpu_custom_call.1} parent=1 // pred_region
      _
    $region9: #{tpu_custom_call.1} parent=1 // pred_fallthru
      _
    // Predicated region
    $region10: #{tpu_custom_call.1} parent=1 // pred_check
      _
    $region11: #{tpu_custom_call.1} parent=1 // pred_check_branch
      %21 = sbr.rel (0) target = $region13
    $region12: #{tpu_custom_call.1} parent=1 // pred_region
      %s23 = ssub.s32 512, 512
      %24 = vsyncadd [#allocation5], %s23
      %s25 = sshll.u32 [#allocation4], 4
      %s26 = int_to_ptr.vmem [resolvable:$true] %s25
      %31 = dma.hbm_to_vmem [thread:$0]  %s2, 512, %s26, [#allocation5], 128, 128, 8
    $region13: #{tpu_custom_call.1} parent=1 // pred_fallthru
      _
    // Predicated region
    $region14: #{tpu_custom_call.1} parent=1 // pred_check
      _
    $region15: #{tpu_custom_call.1} parent=1 // pred_check_branch
      %33 = sbr.rel (0) target = $region17
    $region16: #{tpu_custom_call.1} parent=1 // pred_region
      _
    $region17: #{tpu_custom_call.1} parent=1 // pred_fallthru
      _
    // Predicated region
    $region18: #{tpu_custom_call.1} parent=1 // pred_check
      _
    $region19: #{tpu_custom_call.1} parent=1 // pred_check_branch
      %35 = sbr.rel (0) target = $region21
    $region20: #{tpu_custom_call.1} parent=1 // pred_region
      _
    $region21: #{tpu_custom_call.1} parent=1 // pred_fallthru
      _
    // Predicated region
    $region22: #{tpu_custom_call.1} parent=1 // pred_check
      _
    $region23: #{tpu_custom_call.1} parent=1 // pred_check_branch
      %37 = sbr.rel (0) target = $region25
    $region24: #{tpu_custom_call.1} parent=1 // pred_region
      _
    $region25: #{tpu_custom_call.1} parent=1 // pred_fallthru
      _
    // Predicated region
    $region26: #{tpu_custom_call.1} parent=1 // pred_check
      _
    $region27: #{tpu_custom_call.1} parent=1 // pred_check_branch
      %39 = sbr.rel (0) target = $region29
    $region28: #{tpu_custom_call.1} parent=1 // pred_region
      %s41 = ssub.s32 512, 512
      %42 = vsyncadd [#allocation8], %s41
      %s43 = sshll.u32 [#allocation7], 4
      %s44 = int_to_ptr.vmem [resolvable:$true] %s43
      %49 = dma.hbm_to_vmem [thread:$0]  %s6, 512, %s44, [#allocation8], 128, 128, 8
    $region29: #{tpu_custom_call.1} parent=1 // pred_fallthru
      _
    // Predicated region
    $region30: #{tpu_custom_call.1} parent=1 // pred_check
      _
    $region31: #{tpu_custom_call.1} parent=1 // pred_check_branch
      %51 = sbr.rel (0) target = $region33
    $region32: #{tpu_custom_call.1} parent=1 // pred_region
      _
    $region33: #{tpu_custom_call.1} parent=1 // pred_fallthru
      _
    // Predicated region
    $region34: #{tpu_custom_call.1} parent=1 // pred_check
      _
    $region35: #{tpu_custom_call.1} parent=1 // pred_check_branch
      %53 = sbr.rel (0) target = $region37
    $region36: #{tpu_custom_call.1} parent=1 // pred_region
      %54 = dma.done [#allocation5], 512
    $region37: #{tpu_custom_call.1} parent=1 // pred_fallthru
      _
    // Predicated region
    $region38: #{tpu_custom_call.1} parent=1 // pred_check
      _
    $region39: #{tpu_custom_call.1} parent=1 // pred_check_branch
      %56 = sbr.rel (0) target = $region41
    $region40: #{tpu_custom_call.1} parent=1 // pred_region
      %57 = dma.done [#allocation8], 512
    $region41: #{tpu_custom_call.1} parent=1 // pred_fallthru
      _
    %v58 = vld [vmem:[%s0] sm:$0xff]
    %v59 = vld [vmem:[%s0 + $0x8] sm:$0xff]
    %v60 = vld [vmem:[%s0 + $0x10] sm:$0xff]
    %v61 = vld [vmem:[%s0 + $0x18] sm:$0xff]
    %v62 = vld [vmem:[%s0 + $0x20] sm:$0xff]
    %v63 = vld [vmem:[%s0 + $0x28] sm:$0xff]
    %v64 = vld [vmem:[%s0 + $0x30] sm:$0xff]
    %v65 = vld [vmem:[%s0 + $0x38] sm:$0xff]
    %v66 = vld [vmem:[%s1] sm:$0xf]
    %v67 = vld [vmem:[%s3] sm:$0x1]
    %v69 = vlaneseq
    %v70 = vshrl.u32 %v69, 7
    %v71 = vsub.s32 0, %v70
    %v72 = vrot.slane %v67, %v71
    %vm74 = vcmask 31744
    %v76 = vsel %vm74, %v58, 0
    %v79 = vsel %vm74, %v59, 0
    %v82 = vsel %vm74, %v60, 0
    %v85 = vsel %vm74, %v61, 0
    %v88 = vsel %vm74, %v62, 0
    %v91 = vsel %vm74, %v63, 0
    %v94 = vsel %vm74, %v64, 0
    %v97 = vsel %vm74, %v65, 0
    %vm99 = vcmask 1043456
    %v101 = vsel %vm99, %v66, 0
    %103 = vmatprep.subr.mxu0 0.0
    %104 = vmatpush1.msra.mxu0 0.0
    %105 = vmatprep.subr.mxu0 0.0
    %106 = vmatpush1.msra.mxu0 0.0
    %107 = vmatprep.subr.mxu0 0.0
    %108 = vmatpush1.msra.mxu0 0.0
    %109 = vmatprep.subr.mxu0 0.0
    %110 = vmatpush1.msra.mxu0 0.0
    %111 = vmatprep.subr.mxu0 0.0
    %112 = vmatpush1.msra.mxu0 0.0
    %113 = vmatprep.subr.mxu0 0.0
    %114 = vmatpush1.msra.mxu0 0.0
    %115 = vmatprep.subr.mxu0 0.0
    %116 = vmatpush1.msra.mxu0 0.0
    %117 = vmatprep.subr.mxu0 0.0
    %118 = vmatpush1.msra.mxu0 0.0
    %119 = vmatprep.subr.mxu0 0.0
    %120 = vmatpush1.msra.mxu0 0.0
    %121 = vmatprep.subr.mxu0 0.0
    %122 = vmatpush1.msra.mxu0 0.0
    %123 = vmatprep.subr.mxu0 0.0
    %124 = vmatpush1.msra.mxu0 0.0
    %125 = vmatprep.subr.mxu0 0.0
    %126 = vmatpush1.msra.mxu0 0.0
    %127 = vmatprep.subr.mxu0 0.0
    %128 = vmatpush1.msra.mxu0 0.0
    %129 = vmatprep.subr.mxu0 0.0
    %130 = vmatpush1.msra.mxu0 0.0
    %131 = vmatprep.subr.mxu0 0.0
    %132 = vmatpush1.msra.mxu0 0.0
    %133 = vmatprep.subr.mxu0 0.0
    %134 = vmatpush1.msra.mxu0 %v101
    %135 = vmatprep.subr.mxu0 0.0
    %136 = vmatpush2.msra.mxu0 0.0
    %137 = vmatprep.subr.mxu0 0.0
    %138 = vmatpush2.msra.mxu0 0.0
    %139 = vmatprep.subr.mxu0 0.0
    %140 = vmatpush2.msra.mxu0 0.0
    %141 = vmatprep.subr.mxu0 0.0
    %142 = vmatpush2.msra.mxu0 0.0
    %143 = vmatprep.subr.mxu0 0.0
    %144 = vmatpush2.msra.mxu0 0.0
    %145 = vmatprep.subr.mxu0 0.0
    %146 = vmatpush2.msra.mxu0 0.0
    %147 = vmatprep.subr.mxu0 0.0
    %148 = vmatpush2.msra.mxu0 0.0
    %149 = vmatprep.subr.mxu0 0.0
    %150 = vmatpush2.msra.mxu0 0.0
    %151 = vmatprep.subr.mxu0 0.0
    %152 = vmatpush2.msra.mxu0 0.0
    %153 = vmatprep.subr.mxu0 0.0
    %154 = vmatpush2.msra.mxu0 0.0
    %155 = vmatprep.subr.mxu0 0.0
    %156 = vmatpush2.msra.mxu0 0.0
    %157 = vmatprep.subr.mxu0 0.0
    %158 = vmatpush2.msra.mxu0 0.0
    %159 = vmatprep.subr.mxu0 0.0
    %160 = vmatpush2.msra.mxu0 0.0
    %161 = vmatprep.subr.mxu0 0.0
    %162 = vmatpush2.msra.mxu0 0.0
    %163 = vmatprep.subr.mxu0 0.0
    %164 = vmatpush2.msra.mxu0 0.0
    %165 = vmatprep.subr.mxu0 0.0
    %166 = vmatpush2.msra.mxu0 0.0
    %167 = vmatprep.mubr.f32.mxu0 0.0
    %168 = vmatmul.mubr.f32.gmra.mxu0 %v76
    %v169 = vpop.f32.mrf.mxu0
    %v170 = vadd.f32 %v72, %v169
    %v171 = vpop.f32.mrf.mxu0
    %172 = vmatprep.mubr.f32.mxu0 0.0
    %173 = vmatmul.mubr.f32.gmra.mxu0 %v79
    %v174 = vpop.f32.mrf.mxu0
    %v175 = vadd.f32 %v72, %v174
    %v176 = vpop.f32.mrf.mxu0
    %177 = vmatprep.mubr.f32.mxu0 0.0
    %178 = vmatmul.mubr.f32.gmra.mxu0 %v82
    %v179 = vpop.f32.mrf.mxu0
    %v180 = vadd.f32 %v72, %v179
    %v181 = vpop.f32.mrf.mxu0
    %182 = vmatprep.mubr.f32.mxu0 0.0
    %183 = vmatmul.mubr.f32.gmra.mxu0 %v85
    %v184 = vpop.f32.mrf.mxu0
    %v185 = vadd.f32 %v72, %v184
    %v186 = vpop.f32.mrf.mxu0
    %187 = vmatprep.mubr.f32.mxu0 0.0
    %188 = vmatmul.mubr.f32.gmra.mxu0 %v88
    %v189 = vpop.f32.mrf.mxu0
    %v190 = vadd.f32 %v72, %v189
    %v191 = vpop.f32.mrf.mxu0
    %192 = vmatprep.mubr.f32.mxu0 0.0
    %193 = vmatmul.mubr.f32.gmra.mxu0 %v91
    %v194 = vpop.f32.mrf.mxu0
    %v195 = vadd.f32 %v72, %v194
    %v196 = vpop.f32.mrf.mxu0
    %197 = vmatprep.mubr.f32.mxu0 0.0
    %198 = vmatmul.mubr.f32.gmra.mxu0 %v94
    %v199 = vpop.f32.mrf.mxu0
    %v200 = vadd.f32 %v72, %v199
    %v201 = vpop.f32.mrf.mxu0
    %202 = vmatprep.mubr.f32.mxu0 0.0
    %203 = vmatmul.mubr.f32.gmra.mxu0 %v97
    %v204 = vpop.f32.mrf.mxu0
    %v205 = vadd.f32 %v72, %v204
    %v206 = vpop.f32.mrf.mxu0
    %207 = vdwg.mxu0
    %208 = vst [vmem:[#allocation2] sm:$0xff] %v170
    %209 = vst [vmem:[#allocation2 + $0x8] sm:$0xff] %v175
    %210 = vst [vmem:[#allocation2 + $0x10] sm:$0xff] %v180
    %211 = vst [vmem:[#allocation2 + $0x18] sm:$0xff] %v185
    %212 = vst [vmem:[#allocation2 + $0x20] sm:$0xff] %v190
    %213 = vst [vmem:[#allocation2 + $0x28] sm:$0xff] %v195
    %214 = vst [vmem:[#allocation2 + $0x30] sm:$0xff] %v200
    %215 = vst [vmem:[#allocation2 + $0x38] sm:$0xff] %v205
    %v216 = vld [vmem:[#allocation2] sm:$0xff]
    %v217 = vld [vmem:[#allocation4] sm:$0xff]
    %v218 = vld [vmem:[#allocation4 + $0x8] sm:$0xff]
    %v219 = vld [vmem:[#allocation4 + $0x10] sm:$0xff]
    %v220 = vld [vmem:[#allocation4 + $0x18] sm:$0xff]
    %vm221 = vcmask 261120
    %v223 = vsel %vm221, 0.0, 0
    %225 = vmatprep.subr.mxu0 0.0
    %226 = vmatpush1.msra.mxu0 0.0
    %227 = vmatprep.subr.mxu0 0.0
    %228 = vmatpush1.msra.mxu0 0.0
    %229 = vmatprep.subr.mxu0 0.0
    %230 = vmatpush1.msra.mxu0 0.0
    %231 = vmatprep.subr.mxu0 0.0
    %232 = vmatpush1.msra.mxu0 0.0
    %233 = vmatprep.subr.mxu0 0.0
    %234 = vmatpush1.msra.mxu0 0.0
    %235 = vmatprep.subr.mxu0 0.0
    %236 = vmatpush1.msra.mxu0 0.0
    %237 = vmatprep.subr.mxu0 0.0
    %238 = vmatpush1.msra.mxu0 0.0
    %239 = vmatprep.subr.mxu0 0.0
    %240 = vmatpush1.msra.mxu0 0.0
    %241 = vmatprep.subr.mxu0 0.0
    %242 = vmatpush1.msra.mxu0 0.0
    %243 = vmatprep.subr.mxu0 0.0
    %244 = vmatpush1.msra.mxu0 0.0
    %245 = vmatprep.subr.mxu0 0.0
    %246 = vmatpush1.msra.mxu0 0.0
    %247 = vmatprep.subr.mxu0 0.0
    %248 = vmatpush1.msra.mxu0 0.0
    %249 = vmatprep.subr.mxu0 0.0
    %250 = vmatpush1.msra.mxu0 %v220
    %251 = vmatprep.subr.mxu0 0.0
    %252 = vmatpush1.msra.mxu0 %v219
    %253 = vmatprep.subr.mxu0 0.0
    %254 = vmatpush1.msra.mxu0 %v218
    %255 = vmatprep.subr.mxu0 0.0
    %256 = vmatpush1.msra.mxu0 %v217
    %257 = vmatprep.subr.mxu0 0.0
    %258 = vmatpush2.msra.mxu0 0.0
    %259 = vmatprep.subr.mxu0 0.0
    %260 = vmatpush2.msra.mxu0 0.0
    %261 = vmatprep.subr.mxu0 0.0
    %262 = vmatpush2.msra.mxu0 0.0
    %263 = vmatprep.subr.mxu0 0.0
    %264 = vmatpush2.msra.mxu0 0.0
    %265 = vmatprep.subr.mxu0 0.0
    %266 = vmatpush2.msra.mxu0 0.0
    %267 = vmatprep.subr.mxu0 0.0
    %268 = vmatpush2.msra.mxu0 0.0
    %269 = vmatprep.subr.mxu0 0.0
    %270 = vmatpush2.msra.mxu0 0.0
    %271 = vmatprep.subr.mxu0 0.0
    %272 = vmatpush2.msra.mxu0 0.0
    %273 = vmatprep.subr.mxu0 0.0
    %274 = vmatpush2.msra.mxu0 0.0
    %275 = vmatprep.subr.mxu0 0.0
    %276 = vmatpush2.msra.mxu0 0.0
    %277 = vmatprep.subr.mxu0 0.0
    %278 = vmatpush2.msra.mxu0 0.0
    %279 = vmatprep.subr.mxu0 0.0
    %280 = vmatpush2.msra.mxu0 0.0
    %281 = vmatprep.subr.mxu0 0.0
    %282 = vmatpush2.msra.mxu0 0.0
    %283 = vmatprep.subr.mxu0 0.0
    %284 = vmatpush2.msra.mxu0 0.0
    %285 = vmatprep.subr.mxu0 0.0
    %286 = vmatpush2.msra.mxu0 0.0
    %287 = vmatprep.subr.mxu0 0.0
    %288 = vmatpush2.msra.mxu0 0.0
    %289 = vmatprep.mubr.f32.mxu0 0.0
    %290 = vmatmul.mubr.f32.gmra.mxu0 %v223
    %v291 = vpop.f32.mrf.mxu0
    %v292 = vadd.f32 0.0, %v291
    %v293 = vpop.f32.mrf.mxu0
    %294 = vdwg.mxu0
    %v295 = vadd.f32 %v216, %v292
    %v296 = vxor.u32 %v295, 2147483648
    %v297 = vmul.f32 %v296, 1.442695
    %v298 = vpow.pop %v297
    %v299 = vadd.f32 %v298, 1.0
    %v300 = vrcp.pop %v299
    %v301 = vmul.f32 1.0, %v300
    %v302 = vtanh.pop %v295
    %v303 = vmul.f32 %v301, 0.0
    %305 = vrot.lane.b32.xlu0 %v302, 32
    %v306 = vpop.permute.xlu0 %305
    %v308 = vmul.f32 %v301, %v306
    %310 = vrot.lane.b32.xlu0 %v308, 32
    %v311 = vpop.permute.xlu0 %310
    %v313 = vadd.f32 %v303, %v311
    %v314 = vtanh.pop %v313
    %316 = vrot.lane.b32.xlu0 %v314, 32
    %v317 = vpop.permute.xlu0 %316
    %v319 = vmul.f32 %v301, %v317
    %321 = vrot.lane.b32.xlu0 %v319, 64
    %v322 = vpop.permute.xlu0 %321
    %v324 = vsel %vm221, %v322, 0.0
    %v325 = vld [vmem:[%s4] sm:$0xff]
    %v326 = vld [vmem:[%s4 + $0x8] sm:$0xff]
    %v327 = vld [vmem:[%s4 + $0x10] sm:$0xff]
    %v328 = vld [vmem:[%s4 + $0x18] sm:$0xff]
    %v329 = vld [vmem:[%s4 + $0x20] sm:$0xff]
    %v330 = vld [vmem:[%s4 + $0x28] sm:$0xff]
    %v331 = vld [vmem:[%s4 + $0x30] sm:$0xff]
    %v332 = vld [vmem:[%s4 + $0x38] sm:$0xff]
    %v333 = vld [vmem:[%s5] sm:$0x1]
    %v335 = vlaneseq
    %v336 = vshrl.u32 %v335, 7
    %v337 = vsub.s32 0, %v336
    %v338 = vrot.slane %v333, %v337
    %vm340 = vcmask 523264
    %v342 = vsel %vm340, %v324, 0
    %344 = vmatprep.subr.mxu0 0.0
    %345 = vmatpush1.msra.mxu0 0.0
    %346 = vmatprep.subr.mxu0 0.0
    %347 = vmatpush1.msra.mxu0 0.0
    %348 = vmatprep.subr.mxu0 0.0
    %349 = vmatpush1.msra.mxu0 0.0
    %350 = vmatprep.subr.mxu0 0.0
    %351 = vmatpush1.msra.mxu0 0.0
    %352 = vmatprep.subr.mxu0 0.0
    %353 = vmatpush1.msra.mxu0 0.0
    %354 = vmatprep.subr.mxu0 0.0
    %355 = vmatpush1.msra.mxu0 0.0
    %356 = vmatprep.subr.mxu0 0.0
    %357 = vmatpush1.msra.mxu0 0.0
    %358 = vmatprep.subr.mxu0 0.0
    %359 = vmatpush1.msra.mxu0 0.0
    %360 = vmatprep.subr.mxu0 0.0
    %361 = vmatpush1.msra.mxu0 %v332
    %362 = vmatprep.subr.mxu0 0.0
    %363 = vmatpush1.msra.mxu0 %v331
    %364 = vmatprep.subr.mxu0 0.0
    %365 = vmatpush1.msra.mxu0 %v330
    %366 = vmatprep.subr.mxu0 0.0
    %367 = vmatpush1.msra.mxu0 %v329
    %368 = vmatprep.subr.mxu0 0.0
    %369 = vmatpush1.msra.mxu0 %v328
    %370 = vmatprep.subr.mxu0 0.0
    %371 = vmatpush1.msra.mxu0 %v327
    %372 = vmatprep.subr.mxu0 0.0
    %373 = vmatpush1.msra.mxu0 %v326
    %374 = vmatprep.subr.mxu0 0.0
    %375 = vmatpush1.msra.mxu0 %v325
    %376 = vmatprep.subr.mxu0 0.0
    %377 = vmatpush2.msra.mxu0 0.0
    %378 = vmatprep.subr.mxu0 0.0
    %379 = vmatpush2.msra.mxu0 0.0
    %380 = vmatprep.subr.mxu0 0.0
    %381 = vmatpush2.msra.mxu0 0.0
    %382 = vmatprep.subr.mxu0 0.0
    %383 = vmatpush2.msra.mxu0 0.0
    %384 = vmatprep.subr.mxu0 0.0
    %385 = vmatpush2.msra.mxu0 0.0
    %386 = vmatprep.subr.mxu0 0.0
    %387 = vmatpush2.msra.mxu0 0.0
    %388 = vmatprep.subr.mxu0 0.0
    %389 = vmatpush2.msra.mxu0 0.0
    %390 = vmatprep.subr.mxu0 0.0
    %391 = vmatpush2.msra.mxu0 0.0
    %392 = vmatprep.subr.mxu0 0.0
    %393 = vmatpush2.msra.mxu0 0.0
    %394 = vmatprep.subr.mxu0 0.0
    %395 = vmatpush2.msra.mxu0 0.0
    %396 = vmatprep.subr.mxu0 0.0
    %397 = vmatpush2.msra.mxu0 0.0
    %398 = vmatprep.subr.mxu0 0.0
    %399 = vmatpush2.msra.mxu0 0.0
    %400 = vmatprep.subr.mxu0 0.0
    %401 = vmatpush2.msra.mxu0 0.0
    %402 = vmatprep.subr.mxu0 0.0
    %403 = vmatpush2.msra.mxu0 0.0
    %404 = vmatprep.subr.mxu0 0.0
    %405 = vmatpush2.msra.mxu0 0.0
    %406 = vmatprep.subr.mxu0 0.0
    %407 = vmatpush2.msra.mxu0 0.0
    %408 = vmatprep.mubr.f32.mxu0 0.0
    %409 = vmatmul.mubr.f32.gmra.mxu0 %v342
    %v410 = vpop.f32.mrf.mxu0
    %v411 = vadd.f32 %v338, %v410
    %v412 = vpop.f32.mrf.mxu0
    %413 = vdwg.mxu0
    %v414 = vxor.u32 %v411, 2147483648
    %v415 = vmul.f32 %v414, 1.442695
    %v416 = vpow.pop %v415
    %v417 = vadd.f32 %v416, 1.0
    %v418 = vrcp.pop %v417
    %v419 = vmul.f32 1.0, %v418
    %v420 = vtanh.pop %v411
    %v421 = vmul.f32 %v419, 0.0
    %423 = vrot.lane.b32.xlu0 %v420, 32
    %v424 = vpop.permute.xlu0 %423
    %v426 = vmul.f32 %v419, %v424
    %428 = vrot.lane.b32.xlu0 %v426, 32
    %v429 = vpop.permute.xlu0 %428
    %v431 = vadd.f32 %v421, %v429
    %v432 = vtanh.pop %v431
    %434 = vrot.lane.b32.xlu0 %v432, 32
    %v435 = vpop.permute.xlu0 %434
    %v437 = vmul.f32 %v419, %v435
    %439 = vrot.lane.b32.xlu0 %v437, 64
    %v440 = vpop.permute.xlu0 %439
    %442 = vst.msk [vmem:[#allocation3] sm:$0xff] %vm221, %v440
    %s443 = scalar_lea.vmem [#allocation2], 8
    %v444 = vld [vmem:[%s443] sm:$0xff]
    %v445 = vld [vmem:[#allocation4] sm:$0xff]
    %v446 = vld [vmem:[#allocation4 + $0x8] sm:$0xff]
    %v447 = vld [vmem:[#allocation4 + $0x10] sm:$0xff]
    %v448 = vld [vmem:[#allocation4 + $0x18] sm:$0xff]
    %v449 = vsel %vm221, %v322, 0
    %451 = vmatprep.subr.mxu0 0.0
    %452 = vmatpush1.msra.mxu0 0.0
    %453 = vmatprep.subr.mxu0 0.0
    %454 = vmatpush1.msra.mxu0 0.0
    %455 = vmatprep.subr.mxu0 0.0
    %456 = vmatpush1.msra.mxu0 0.0
    %457 = vmatprep.subr.mxu0 0.0
    %458 = vmatpush1.msra.mxu0 0.0
    %459 = vmatprep.subr.mxu0 0.0
    %460 = vmatpush1.msra.mxu0 0.0
    %461 = vmatprep.subr.mxu0 0.0
    %462 = vmatpush1.msra.mxu0 0.0
    %463 = vmatprep.subr.mxu0 0.0
    %464 = vmatpush1.msra.mxu0 0.0
    %465 = vmatprep.subr.mxu0 0.0
    %466 = vmatpush1.msra.mxu0 0.0
    %467 = vmatprep.subr.mxu0 0.0
    %468 = vmatpush1.msra.mxu0 0.0
    %469 = vmatprep.subr.mxu0 0.0
    %470 = vmatpush1.msra.mxu0 0.0
    %471 = vmatprep.subr.mxu0 0.0
    %472 = vmatpush1.msra.mxu0 0.0
    %473 = vmatprep.subr.mxu0 0.0
    %474 = vmatpush1.msra.mxu0 0.0
    %475 = vmatprep.subr.mxu0 0.0
    %476 = vmatpush1.msra.mxu0 %v448
    %477 = vmatprep.subr.mxu0 0.0
    %478 = vmatpush1.msra.mxu0 %v447
    %479 = vmatprep.subr.mxu0 0.0
    %480 = vmatpush1.msra.mxu0 %v446
    %481 = vmatprep.subr.mxu0 0.0
    %482 = vmatpush1.msra.mxu0 %v445
    %483 = vmatprep.subr.mxu0 0.0
    %484 = vmatpush2.msra.mxu0 0.0
    %485 = vmatprep.subr.mxu0 0.0
    %486 = vmatpush2.msra.mxu0 0.0
    %487 = vmatprep.subr.mxu0 0.0
    %488 = vmatpush2.msra.mxu0 0.0
    %489 = vmatprep.subr.mxu0 0.0
    %490 = vmatpush2.msra.mxu0 0.0
    %491 = vmatprep.subr.mxu0 0.0
    %492 = vmatpush2.msra.mxu0 0.0
    %493 = vmatprep.subr.mxu0 0.0
    %494 = vmatpush2.msra.mxu0 0.0
    %495 = vmatprep.subr.mxu0 0.0
    %496 = vmatpush2.msra.mxu0 0.0
    %497 = vmatprep.subr.mxu0 0.0
    %498 = vmatpush2.msra.mxu0 0.0
    %499 = vmatprep.subr.mxu0 0.0
    %500 = vmatpush2.msra.mxu0 0.0
    %501 = vmatprep.subr.mxu0 0.0
    %502 = vmatpush2.msra.mxu0 0.0
    %503 = vmatprep.subr.mxu0 0.0
    %504 = vmatpush2.msra.mxu0 0.0
    %505 = vmatprep.subr.mxu0 0.0
    %506 = vmatpush2.msra.mxu0 0.0
    %507 = vmatprep.subr.mxu0 0.0
    %508 = vmatpush2.msra.mxu0 0.0
    %509 = vmatprep.subr.mxu0 0.0
    %510 = vmatpush2.msra.mxu0 0.0
    %511 = vmatprep.subr.mxu0 0.0
    %512 = vmatpush2.msra.mxu0 0.0
    %513 = vmatprep.subr.mxu0 0.0
    %514 = vmatpush2.msra.mxu0 0.0
    %515 = vmatprep.mubr.f32.mxu0 0.0
    %516 = vmatmul.mubr.f32.gmra.mxu0 %v449
    %v517 = vpop.f32.mrf.mxu0
    %v518 = vadd.f32 0.0, %v517
    %v519 = vpop.f32.mrf.mxu0
    %520 = vdwg.mxu0
    %v521 = vadd.f32 %v444, %v518
    %v522 = vxor.u32 %v521, 2147483648
    %v523 = vmul.f32 %v522, 1.442695
    %v524 = vpow.pop %v523
    %v525 = vadd.f32 %v524, 1.0
    %v526 = vrcp.pop %v525
    %v527 = vmul.f32 1.0, %v526
    %v528 = vtanh.pop %v521
    %v529 = vmul.f32 %v527, %v313
    %531 = vrot.lane.b32.xlu0 %v528, 32
    %v532 = vpop.permute.xlu0 %531
    %v534 = vmul.f32 %v527, %v532
    %536 = vrot.lane.b32.xlu0 %v534, 32
    %v537 = vpop.permute.xlu0 %536
    %v539 = vadd.f32 %v529, %v537
    %v540 = vtanh.pop %v539
    %542 = vrot.lane.b32.xlu0 %v540, 32
    %v543 = vpop.permute.xlu0 %542
    %v545 = vmul.f32 %v527, %v543
    %547 = vrot.lane.b32.xlu0 %v545, 64
    %v548 = vpop.permute.xlu0 %547
    %550 = vrot.lane.b32.xlu0 %v437, 96
    %v551 = vpop.permute.xlu0 %550
    %v553 = vsel %vm221, %v548, %v551
    %v554 = vld [vmem:[%s4] sm:$0xff]
    %v555 = vld [vmem:[%s4 + $0x8] sm:$0xff]
    %v556 = vld [vmem:[%s4 + $0x10] sm:$0xff]
    %v557 = vld [vmem:[%s4 + $0x18] sm:$0xff]
    %v558 = vld [vmem:[%s4 + $0x20] sm:$0xff]
    %v559 = vld [vmem:[%s4 + $0x28] sm:$0xff]
    %v560 = vld [vmem:[%s4 + $0x30] sm:$0xff]
    %v561 = vld [vmem:[%s4 + $0x38] sm:$0xff]
    %v562 = vld [vmem:[%s5] sm:$0x1]
    %v564 = vlaneseq
    %v565 = vshrl.u32 %v564, 7
    %v566 = vsub.s32 0, %v565
    %v567 = vrot.slane %v562, %v566
    %v570 = vsel %vm340, %v553, 0
    %572 = vmatprep.subr.mxu0 0.0
    %573 = vmatpush1.msra.mxu0 0.0
    %574 = vmatprep.subr.mxu0 0.0
    %575 = vmatpush1.msra.mxu0 0.0
    %576 = vmatprep.subr.mxu0 0.0
    %577 = vmatpush1.msra.mxu0 0.0
    %578 = vmatprep.subr.mxu0 0.0
    %579 = vmatpush1.msra.mxu0 0.0
    %580 = vmatprep.subr.mxu0 0.0
    %581 = vmatpush1.msra.mxu0 0.0
    %582 = vmatprep.subr.mxu0 0.0
    %583 = vmatpush1.msra.mxu0 0.0
    %584 = vmatprep.subr.mxu0 0.0
    %585 = vmatpush1.msra.mxu0 0.0
    %586 = vmatprep.subr.mxu0 0.0
    %587 = vmatpush1.msra.mxu0 0.0
    %588 = vmatprep.subr.mxu0 0.0
    %589 = vmatpush1.msra.mxu0 %v561
    %590 = vmatprep.subr.mxu0 0.0
    %591 = vmatpush1.msra.mxu0 %v560
    %592 = vmatprep.subr.mxu0 0.0
    %593 = vmatpush1.msra.mxu0 %v559
    %594 = vmatprep.subr.mxu0 0.0
    %595 = vmatpush1.msra.mxu0 %v558
    %596 = vmatprep.subr.mxu0 0.0
    %597 = vmatpush1.msra.mxu0 %v557
    %598 = vmatprep.subr.mxu0 0.0
    %599 = vmatpush1.msra.mxu0 %v556
    %600 = vmatprep.subr.mxu0 0.0
    %601 = vmatpush1.msra.mxu0 %v555
    %602 = vmatprep.subr.mxu0 0.0
    %603 = vmatpush1.msra.mxu0 %v554
    %604 = vmatprep.subr.mxu0 0.0
    %605 = vmatpush2.msra.mxu0 0.0
    %606 = vmatprep.subr.mxu0 0.0
    %607 = vmatpush2.msra.mxu0 0.0
    %608 = vmatprep.subr.mxu0 0.0
    %609 = vmatpush2.msra.mxu0 0.0
    %610 = vmatprep.subr.mxu0 0.0
    %611 = vmatpush2.msra.mxu0 0.0
    %612 = vmatprep.subr.mxu0 0.0
    %613 = vmatpush2.msra.mxu0 0.0
    %614 = vmatprep.subr.mxu0 0.0
    %615 = vmatpush2.msra.mxu0 0.0
    %616 = vmatprep.subr.mxu0 0.0
    %617 = vmatpush2.msra.mxu0 0.0
    %618 = vmatprep.subr.mxu0 0.0
    %619 = vmatpush2.msra.mxu0 0.0
    %620 = vmatprep.subr.mxu0 0.0
    %621 = vmatpush2.msra.mxu0 0.0
    %622 = vmatprep.subr.mxu0 0.0
    %623 = vmatpush2.msra.mxu0 0.0
    %624 = vmatprep.subr.mxu0 0.0
    %625 = vmatpush2.msra.mxu0 0.0
    %626 = vmatprep.subr.mxu0 0.0
    %627 = vmatpush2.msra.mxu0 0.0
    %628 = vmatprep.subr.mxu0 0.0
    %629 = vmatpush2.msra.mxu0 0.0
    %630 = vmatprep.subr.mxu0 0.0
    %631 = vmatpush2.msra.mxu0 0.0
    %632 = vmatprep.subr.mxu0 0.0
    %633 = vmatpush2.msra.mxu0 0.0
    %634 = vmatprep.subr.mxu0 0.0
    %635 = vmatpush2.msra.mxu0 0.0
    %636 = vmatprep.mubr.f32.mxu0 0.0
    %637 = vmatmul.mubr.f32.gmra.mxu0 %v570
    %v638 = vpop.f32.mrf.mxu0
    %v639 = vadd.f32 %v567, %v638
    %v640 = vpop.f32.mrf.mxu0
    %641 = vdwg.mxu0
    %v642 = vxor.u32 %v639, 2147483648
    %v643 = vmul.f32 %v642, 1.442695
    %v644 = vpow.pop %v643
    %v645 = vadd.f32 %v644, 1.0
    %v646 = vrcp.pop %v645
    %v647 = vmul.f32 1.0, %v646
    %v648 = vtanh.pop %v639
    %v649 = vmul.f32 %v647, %v431
    %651 = vrot.lane.b32.xlu0 %v648, 32
    %v652 = vpop.permute.xlu0 %651
    %v654 = vmul.f32 %v647, %v652
    %656 = vrot.lane.b32.xlu0 %v654, 32
    %v657 = vpop.permute.xlu0 %656
    %v659 = vadd.f32 %v649, %v657
    %v660 = vtanh.pop %v659
    %662 = vrot.lane.b32.xlu0 %v660, 32
    %v663 = vpop.permute.xlu0 %662
    %v665 = vmul.f32 %v647, %v663
    %667 = vrot.lane.b32.xlu0 %v665, 64
    %v668 = vpop.permute.xlu0 %667
    %s670 = scalar_lea.vmem [#allocation3], 8
    %671 = vst.msk [vmem:[%s670] sm:$0xff] %vm221, %v668
    %s672 = scalar_lea.vmem [#allocation2], 16
    %v673 = vld [vmem:[%s672] sm:$0xff]
    %v674 = vld [vmem:[#allocation4] sm:$0xff]
    %v675 = vld [vmem:[#allocation4 + $0x8] sm:$0xff]
    %v676 = vld [vmem:[#allocation4 + $0x10] sm:$0xff]
    %v677 = vld [vmem:[#allocation4 + $0x18] sm:$0xff]
    %v678 = vsel %vm221, %v548, 0
    %680 = vmatprep.subr.mxu0 0.0
    %681 = vmatpush1.msra.mxu0 0.0
    %682 = vmatprep.subr.mxu0 0.0
    %683 = vmatpush1.msra.mxu0 0.0
    %684 = vmatprep.subr.mxu0 0.0
    %685 = vmatpush1.msra.mxu0 0.0
    %686 = vmatprep.subr.mxu0 0.0
    %687 = vmatpush1.msra.mxu0 0.0
    %688 = vmatprep.subr.mxu0 0.0
    %689 = vmatpush1.msra.mxu0 0.0
    %690 = vmatprep.subr.mxu0 0.0
    %691 = vmatpush1.msra.mxu0 0.0
    %692 = vmatprep.subr.mxu0 0.0
    %693 = vmatpush1.msra.mxu0 0.0
    %694 = vmatprep.subr.mxu0 0.0
    %695 = vmatpush1.msra.mxu0 0.0
    %696 = vmatprep.subr.mxu0 0.0
    %697 = vmatpush1.msra.mxu0 0.0
    %698 = vmatprep.subr.mxu0 0.0
    %699 = vmatpush1.msra.mxu0 0.0
    %700 = vmatprep.subr.mxu0 0.0
    %701 = vmatpush1.msra.mxu0 0.0
    %702 = vmatprep.subr.mxu0 0.0
    %703 = vmatpush1.msra.mxu0 0.0
    %704 = vmatprep.subr.mxu0 0.0
    %705 = vmatpush1.msra.mxu0 %v677
    %706 = vmatprep.subr.mxu0 0.0
    %707 = vmatpush1.msra.mxu0 %v676
    %708 = vmatprep.subr.mxu0 0.0
    %709 = vmatpush1.msra.mxu0 %v675
    %710 = vmatprep.subr.mxu0 0.0
    %711 = vmatpush1.msra.mxu0 %v674
    %712 = vmatprep.subr.mxu0 0.0
    %713 = vmatpush2.msra.mxu0 0.0
    %714 = vmatprep.subr.mxu0 0.0
    %715 = vmatpush2.msra.mxu0 0.0
    %716 = vmatprep.subr.mxu0 0.0
    %717 = vmatpush2.msra.mxu0 0.0
    %718 = vmatprep.subr.mxu0 0.0
    %719 = vmatpush2.msra.mxu0 0.0
    %720 = vmatprep.subr.mxu0 0.0
    %721 = vmatpush2.msra.mxu0 0.0
    %722 = vmatprep.subr.mxu0 0.0
    %723 = vmatpush2.msra.mxu0 0.0
    %724 = vmatprep.subr.mxu0 0.0
    %725 = vmatpush2.msra.mxu0 0.0
    %726 = vmatprep.subr.mxu0 0.0
    %727 = vmatpush2.msra.mxu0 0.0
    %728 = vmatprep.subr.mxu0 0.0
    %729 = vmatpush2.msra.mxu0 0.0
    %730 = vmatprep.subr.mxu0 0.0
    %731 = vmatpush2.msra.mxu0 0.0
    %732 = vmatprep.subr.mxu0 0.0
    %733 = vmatpush2.msra.mxu0 0.0
    %734 = vmatprep.subr.mxu0 0.0
    %735 = vmatpush2.msra.mxu0 0.0
    %736 = vmatprep.subr.mxu0 0.0
    %737 = vmatpush2.msra.mxu0 0.0
    %738 = vmatprep.subr.mxu0 0.0
    %739 = vmatpush2.msra.mxu0 0.0
    %740 = vmatprep.subr.mxu0 0.0
    %741 = vmatpush2.msra.mxu0 0.0
    %742 = vmatprep.subr.mxu0 0.0
    %743 = vmatpush2.msra.mxu0 0.0
    %744 = vmatprep.mubr.f32.mxu0 0.0
    %745 = vmatmul.mubr.f32.gmra.mxu0 %v678
    %v746 = vpop.f32.mrf.mxu0
    %v747 = vadd.f32 0.0, %v746
    %v748 = vpop.f32.mrf.mxu0
    %749 = vdwg.mxu0
    %v750 = vadd.f32 %v673, %v747
    %v751 = vxor.u32 %v750, 2147483648
    %v752 = vmul.f32 %v751, 1.442695
    %v753 = vpow.pop %v752
    %v754 = vadd.f32 %v753, 1.0
    %v755 = vrcp.pop %v754
    %v756 = vmul.f32 1.0, %v755
    %v757 = vtanh.pop %v750
    %v758 = vmul.f32 %v756, %v539
    %760 = vrot.lane.b32.xlu0 %v757, 32
    %v761 = vpop.permute.xlu0 %760
    %v763 = vmul.f32 %v756, %v761
    %765 = vrot.lane.b32.xlu0 %v763, 32
    %v766 = vpop.permute.xlu0 %765
    %v768 = vadd.f32 %v758, %v766
    %v769 = vtanh.pop %v768
    %771 = vrot.lane.b32.xlu0 %v769, 32
    %v772 = vpop.permute.xlu0 %771
    %v774 = vmul.f32 %v756, %v772
    %776 = vrot.lane.b32.xlu0 %v774, 64
    %v777 = vpop.permute.xlu0 %776
    %779 = vrot.lane.b32.xlu0 %v665, 96
    %v780 = vpop.permute.xlu0 %779
    %v782 = vsel %vm221, %v777, %v780
    %v783 = vld [vmem:[%s4] sm:$0xff]
    %v784 = vld [vmem:[%s4 + $0x8] sm:$0xff]
    %v785 = vld [vmem:[%s4 + $0x10] sm:$0xff]
    %v786 = vld [vmem:[%s4 + $0x18] sm:$0xff]
    %v787 = vld [vmem:[%s4 + $0x20] sm:$0xff]
    %v788 = vld [vmem:[%s4 + $0x28] sm:$0xff]
    %v789 = vld [vmem:[%s4 + $0x30] sm:$0xff]
    %v790 = vld [vmem:[%s4 + $0x38] sm:$0xff]
    %v791 = vld [vmem:[%s5] sm:$0x1]
    %v793 = vlaneseq
    %v794 = vshrl.u32 %v793, 7
    %v795 = vsub.s32 0, %v794
    %v796 = vrot.slane %v791, %v795
    %v799 = vsel %vm340, %v782, 0
    %801 = vmatprep.subr.mxu0 0.0
    %802 = vmatpush1.msra.mxu0 0.0
    %803 = vmatprep.subr.mxu0 0.0
    %804 = vmatpush1.msra.mxu0 0.0
    %805 = vmatprep.subr.mxu0 0.0
    %806 = vmatpush1.msra.mxu0 0.0
    %807 = vmatprep.subr.mxu0 0.0
    %808 = vmatpush1.msra.mxu0 0.0
    %809 = vmatprep.subr.mxu0 0.0
    %810 = vmatpush1.msra.mxu0 0.0
    %811 = vmatprep.subr.mxu0 0.0
    %812 = vmatpush1.msra.mxu0 0.0
    %813 = vmatprep.subr.mxu0 0.0
    %814 = vmatpush1.msra.mxu0 0.0
    %815 = vmatprep.subr.mxu0 0.0
    %816 = vmatpush1.msra.mxu0 0.0
    %817 = vmatprep.subr.mxu0 0.0
    %818 = vmatpush1.msra.mxu0 %v790
    %819 = vmatprep.subr.mxu0 0.0
    %820 = vmatpush1.msra.mxu0 %v789
    %821 = vmatprep.subr.mxu0 0.0
    %822 = vmatpush1.msra.mxu0 %v788
    %823 = vmatprep.subr.mxu0 0.0
    %824 = vmatpush1.msra.mxu0 %v787
    %825 = vmatprep.subr.mxu0 0.0
    %826 = vmatpush1.msra.mxu0 %v786
    %827 = vmatprep.subr.mxu0 0.0
    %828 = vmatpush1.msra.mxu0 %v785
    %829 = vmatprep.subr.mxu0 0.0
    %830 = vmatpush1.msra.mxu0 %v784
    %831 = vmatprep.subr.mxu0 0.0
    %832 = vmatpush1.msra.mxu0 %v783
    %833 = vmatprep.subr.mxu0 0.0
    %834 = vmatpush2.msra.mxu0 0.0
    %835 = vmatprep.subr.mxu0 0.0
    %836 = vmatpush2.msra.mxu0 0.0
    %837 = vmatprep.subr.mxu0 0.0
    %838 = vmatpush2.msra.mxu0 0.0
    %839 = vmatprep.subr.mxu0 0.0
    %840 = vmatpush2.msra.mxu0 0.0
    %841 = vmatprep.subr.mxu0 0.0
    %842 = vmatpush2.msra.mxu0 0.0
    %843 = vmatprep.subr.mxu0 0.0
    %844 = vmatpush2.msra.mxu0 0.0
    %845 = vmatprep.subr.mxu0 0.0
    %846 = vmatpush2.msra.mxu0 0.0
    %847 = vmatprep.subr.mxu0 0.0
    %848 = vmatpush2.msra.mxu0 0.0
    %849 = vmatprep.subr.mxu0 0.0
    %850 = vmatpush2.msra.mxu0 0.0
    %851 = vmatprep.subr.mxu0 0.0
    %852 = vmatpush2.msra.mxu0 0.0
    %853 = vmatprep.subr.mxu0 0.0
    %854 = vmatpush2.msra.mxu0 0.0
    %855 = vmatprep.subr.mxu0 0.0
    %856 = vmatpush2.msra.mxu0 0.0
    %857 = vmatprep.subr.mxu0 0.0
    %858 = vmatpush2.msra.mxu0 0.0
    %859 = vmatprep.subr.mxu0 0.0
    %860 = vmatpush2.msra.mxu0 0.0
    %861 = vmatprep.subr.mxu0 0.0
    %862 = vmatpush2.msra.mxu0 0.0
    %863 = vmatprep.subr.mxu0 0.0
    %864 = vmatpush2.msra.mxu0 0.0
    %865 = vmatprep.mubr.f32.mxu0 0.0
    %866 = vmatmul.mubr.f32.gmra.mxu0 %v799
    %v867 = vpop.f32.mrf.mxu0
    %v868 = vadd.f32 %v796, %v867
    %v869 = vpop.f32.mrf.mxu0
    %870 = vdwg.mxu0
    %v871 = vxor.u32 %v868, 2147483648
    %v872 = vmul.f32 %v871, 1.442695
    %v873 = vpow.pop %v872
    %v874 = vadd.f32 %v873, 1.0
    %v875 = vrcp.pop %v874
    %v876 = vmul.f32 1.0, %v875
    %v877 = vtanh.pop %v868
    %v878 = vmul.f32 %v876, %v659
    %880 = vrot.lane.b32.xlu0 %v877, 32
    %v881 = vpop.permute.xlu0 %880
    %v883 = vmul.f32 %v876, %v881
    %885 = vrot.lane.b32.xlu0 %v883, 32
    %v886 = vpop.permute.xlu0 %885
    %v888 = vadd.f32 %v878, %v886
    %v889 = vtanh.pop %v888
    %891 = vrot.lane.b32.xlu0 %v889, 32
    %v892 = vpop.permute.xlu0 %891
    %v894 = vmul.f32 %v876, %v892
    %896 = vrot.lane.b32.xlu0 %v894, 64
    %v897 = vpop.permute.xlu0 %896
    %s899 = scalar_lea.vmem [#allocation3], 16
    %900 = vst.msk [vmem:[%s899] sm:$0xff] %vm221, %v897
    %s901 = scalar_lea.vmem [#allocation2], 24
    %v902 = vld [vmem:[%s901] sm:$0xff]
    %v903 = vld [vmem:[#allocation4] sm:$0xff]
    %v904 = vld [vmem:[#allocation4 + $0x8] sm:$0xff]
    %v905 = vld [vmem:[#allocation4 + $0x10] sm:$0xff]
    %v906 = vld [vmem:[#allocation4 + $0x18] sm:$0xff]
    %v907 = vsel %vm221, %v777, 0
    %909 = vmatprep.subr.mxu0 0.0
    %910 = vmatpush1.msra.mxu0 0.0
    %911 = vmatprep.subr.mxu0 0.0
    %912 = vmatpush1.msra.mxu0 0.0
    %913 = vmatprep.subr.mxu0 0.0
    %914 = vmatpush1.msra.mxu0 0.0
    %915 = vmatprep.subr.mxu0 0.0
    %916 = vmatpush1.msra.mxu0 0.0
    %917 = vmatprep.subr.mxu0 0.0
    %918 = vmatpush1.msra.mxu0 0.0
    %919 = vmatprep.subr.mxu0 0.0
    %920 = vmatpush1.msra.mxu0 0.0
    %921 = vmatprep.subr.mxu0 0.0
    %922 = vmatpush1.msra.mxu0 0.0
    %923 = vmatprep.subr.mxu0 0.0
    %924 = vmatpush1.msra.mxu0 0.0
    %925 = vmatprep.subr.mxu0 0.0
    %926 = vmatpush1.msra.mxu0 0.0
    %927 = vmatprep.subr.mxu0 0.0
    %928 = vmatpush1.msra.mxu0 0.0
    %929 = vmatprep.subr.mxu0 0.0
    %930 = vmatpush1.msra.mxu0 0.0
    %931 = vmatprep.subr.mxu0 0.0
    %932 = vmatpush1.msra.mxu0 0.0
    %933 = vmatprep.subr.mxu0 0.0
    %934 = vmatpush1.msra.mxu0 %v906
    %935 = vmatprep.subr.mxu0 0.0
    %936 = vmatpush1.msra.mxu0 %v905
    %937 = vmatprep.subr.mxu0 0.0
    %938 = vmatpush1.msra.mxu0 %v904
    %939 = vmatprep.subr.mxu0 0.0
    %940 = vmatpush1.msra.mxu0 %v903
    %941 = vmatprep.subr.mxu0 0.0
    %942 = vmatpush2.msra.mxu0 0.0
    %943 = vmatprep.subr.mxu0 0.0
    %944 = vmatpush2.msra.mxu0 0.0
    %945 = vmatprep.subr.mxu0 0.0
    %946 = vmatpush2.msra.mxu0 0.0
    %947 = vmatprep.subr.mxu0 0.0
    %948 = vmatpush2.msra.mxu0 0.0
    %949 = vmatprep.subr.mxu0 0.0
    %950 = vmatpush2.msra.mxu0 0.0
    %951 = vmatprep.subr.mxu0 0.0
    %952 = vmatpush2.msra.mxu0 0.0
    %953 = vmatprep.subr.mxu0 0.0
    %954 = vmatpush2.msra.mxu0 0.0
    %955 = vmatprep.subr.mxu0 0.0
    %956 = vmatpush2.msra.mxu0 0.0
    %957 = vmatprep.subr.mxu0 0.0
    %958 = vmatpush2.msra.mxu0 0.0
    %959 = vmatprep.subr.mxu0 0.0
    %960 = vmatpush2.msra.mxu0 0.0
    %961 = vmatprep.subr.mxu0 0.0
    %962 = vmatpush2.msra.mxu0 0.0
    %963 = vmatprep.subr.mxu0 0.0
    %964 = vmatpush2.msra.mxu0 0.0
    %965 = vmatprep.subr.mxu0 0.0
    %966 = vmatpush2.msra.mxu0 0.0
    %967 = vmatprep.subr.mxu0 0.0
    %968 = vmatpush2.msra.mxu0 0.0
    %969 = vmatprep.subr.mxu0 0.0
    %970 = vmatpush2.msra.mxu0 0.0
    %971 = vmatprep.subr.mxu0 0.0
    %972 = vmatpush2.msra.mxu0 0.0
    %973 = vmatprep.mubr.f32.mxu0 0.0
    %974 = vmatmul.mubr.f32.gmra.mxu0 %v907
    %v975 = vpop.f32.mrf.mxu0
    %v976 = vadd.f32 0.0, %v975
    %v977 = vpop.f32.mrf.mxu0
    %978 = vdwg.mxu0
    %v979 = vadd.f32 %v902, %v976
    %v980 = vxor.u32 %v979, 2147483648
    %v981 = vmul.f32 %v980, 1.442695
    %v982 = vpow.pop %v981
    %v983 = vadd.f32 %v982, 1.0
    %v984 = vrcp.pop %v983
    %v985 = vmul.f32 1.0, %v984
    %v986 = vtanh.pop %v979
    %v987 = vmul.f32 %v985, %v768
    %989 = vrot.lane.b32.xlu0 %v986, 32
    %v990 = vpop.permute.xlu0 %989
    %v992 = vmul.f32 %v985, %v990
    %994 = vrot.lane.b32.xlu0 %v992, 32
    %v995 = vpop.permute.xlu0 %994
    %v997 = vadd.f32 %v987, %v995
    %v998 = vtanh.pop %v997
    %1000 = vrot.lane.b32.xlu0 %v998, 32
    %v1001 = vpop.permute.xlu0 %1000
    %v1003 = vmul.f32 %v985, %v1001
    %1005 = vrot.lane.b32.xlu0 %v1003, 64
    %v1006 = vpop.permute.xlu0 %1005
    %1008 = vrot.lane.b32.xlu0 %v894, 96
    %v1009 = vpop.permute.xlu0 %1008
    %v1011 = vsel %vm221, %v1006, %v1009
    %v1012 = vld [vmem:[%s4] sm:$0xff]
    %v1013 = vld [vmem:[%s4 + $0x8] sm:$0xff]
    %v1014 = vld [vmem:[%s4 + $0x10] sm:$0xff]
    %v1015 = vld [vmem:[%s4 + $0x18] sm:$0xff]
    %v1016 = vld [vmem:[%s4 + $0x20] sm:$0xff]
    %v1017 = vld [vmem:[%s4 + $0x28] sm:$0xff]
    %v1018 = vld [vmem:[%s4 + $0x30] sm:$0xff]
    %v1019 = vld [vmem:[%s4 + $0x38] sm:$0xff]
    %v1020 = vld [vmem:[%s5] sm:$0x1]
    %v1022 = vlaneseq
    %v1023 = vshrl.u32 %v1022, 7
    %v1024 = vsub.s32 0, %v1023
    %v1025 = vrot.slane %v1020, %v1024
    %v1028 = vsel %vm340, %v1011, 0
    %1030 = vmatprep.subr.mxu0 0.0
    %1031 = vmatpush1.msra.mxu0 0.0
    %1032 = vmatprep.subr.mxu0 0.0
    %1033 = vmatpush1.msra.mxu0 0.0
    %1034 = vmatprep.subr.mxu0 0.0
    %1035 = vmatpush1.msra.mxu0 0.0
    %1036 = vmatprep.subr.mxu0 0.0
    %1037 = vmatpush1.msra.mxu0 0.0
    %1038 = vmatprep.subr.mxu0 0.0
    %1039 = vmatpush1.msra.mxu0 0.0
    %1040 = vmatprep.subr.mxu0 0.0
    %1041 = vmatpush1.msra.mxu0 0.0
    %1042 = vmatprep.subr.mxu0 0.0
    %1043 = vmatpush1.msra.mxu0 0.0
    %1044 = vmatprep.subr.mxu0 0.0
    %1045 = vmatpush1.msra.mxu0 0.0
    %1046 = vmatprep.subr.mxu0 0.0
    %1047 = vmatpush1.msra.mxu0 %v1019
    %1048 = vmatprep.subr.mxu0 0.0
    %1049 = vmatpush1.msra.mxu0 %v1018
    %1050 = vmatprep.subr.mxu0 0.0
    %1051 = vmatpush1.msra.mxu0 %v1017
    %1052 = vmatprep.subr.mxu0 0.0
    %1053 = vmatpush1.msra.mxu0 %v1016
    %1054 = vmatprep.subr.mxu0 0.0
    %1055 = vmatpush1.msra.mxu0 %v1015
    %1056 = vmatprep.subr.mxu0 0.0
    %1057 = vmatpush1.msra.mxu0 %v1014
    %1058 = vmatprep.subr.mxu0 0.0
    %1059 = vmatpush1.msra.mxu0 %v1013
    %1060 = vmatprep.subr.mxu0 0.0
    %1061 = vmatpush1.msra.mxu0 %v1012
    %1062 = vmatprep.subr.mxu0 0.0
    %1063 = vmatpush2.msra.mxu0 0.0
    %1064 = vmatprep.subr.mxu0 0.0
    %1065 = vmatpush2.msra.mxu0 0.0
    %1066 = vmatprep.subr.mxu0 0.0
    %1067 = vmatpush2.msra.mxu0 0.0
    %1068 = vmatprep.subr.mxu0 0.0
    %1069 = vmatpush2.msra.mxu0 0.0
    %1070 = vmatprep.subr.mxu0 0.0
    %1071 = vmatpush2.msra.mxu0 0.0
    %1072 = vmatprep.subr.mxu0 0.0
    %1073 = vmatpush2.msra.mxu0 0.0
    %1074 = vmatprep.subr.mxu0 0.0
    %1075 = vmatpush2.msra.mxu0 0.0
    %1076 = vmatprep.subr.mxu0 0.0
    %1077 = vmatpush2.msra.mxu0 0.0
    %1078 = vmatprep.subr.mxu0 0.0
    %1079 = vmatpush2.msra.mxu0 0.0
    %1080 = vmatprep.subr.mxu0 0.0
    %1081 = vmatpush2.msra.mxu0 0.0
    %1082 = vmatprep.subr.mxu0 0.0
    %1083 = vmatpush2.msra.mxu0 0.0
    %1084 = vmatprep.subr.mxu0 0.0
    %1085 = vmatpush2.msra.mxu0 0.0
    %1086 = vmatprep.subr.mxu0 0.0
    %1087 = vmatpush2.msra.mxu0 0.0
    %1088 = vmatprep.subr.mxu0 0.0
    %1089 = vmatpush2.msra.mxu0 0.0
    %1090 = vmatprep.subr.mxu0 0.0
    %1091 = vmatpush2.msra.mxu0 0.0
    %1092 = vmatprep.subr.mxu0 0.0
    %1093 = vmatpush2.msra.mxu0 0.0
    %1094 = vmatprep.mubr.f32.mxu0 0.0
    %1095 = vmatmul.mubr.f32.gmra.mxu0 %v1028
    %v1096 = vpop.f32.mrf.mxu0
    %v1097 = vadd.f32 %v1025, %v1096
    %v1098 = vpop.f32.mrf.mxu0
    %1099 = vdwg.mxu0
    %v1100 = vxor.u32 %v1097, 2147483648
    %v1101 = vmul.f32 %v1100, 1.442695
    %v1102 = vpow.pop %v1101
    %v1103 = vadd.f32 %v1102, 1.0
    %v1104 = vrcp.pop %v1103
    %v1105 = vmul.f32 1.0, %v1104
    %v1106 = vtanh.pop %v1097
    %v1107 = vmul.f32 %v1105, %v888
    %1109 = vrot.lane.b32.xlu0 %v1106, 32
    %v1110 = vpop.permute.xlu0 %1109
    %v1112 = vmul.f32 %v1105, %v1110
    %1114 = vrot.lane.b32.xlu0 %v1112, 32
    %v1115 = vpop.permute.xlu0 %1114
    %v1117 = vadd.f32 %v1107, %v1115
    %v1118 = vtanh.pop %v1117
    %1120 = vrot.lane.b32.xlu0 %v1118, 32
    %v1121 = vpop.permute.xlu0 %1120
    %v1123 = vmul.f32 %v1105, %v1121
    %1125 = vrot.lane.b32.xlu0 %v1123, 64
    %v1126 = vpop.permute.xlu0 %1125
    %s1128 = scalar_lea.vmem [#allocation3], 24
    %1129 = vst.msk [vmem:[%s1128] sm:$0xff] %vm221, %v1126
    %s1130 = scalar_lea.vmem [#allocation2], 32
    %v1131 = vld [vmem:[%s1130] sm:$0xff]
    %v1132 = vld [vmem:[#allocation4] sm:$0xff]
    %v1133 = vld [vmem:[#allocation4 + $0x8] sm:$0xff]
    %v1134 = vld [vmem:[#allocation4 + $0x10] sm:$0xff]
    %v1135 = vld [vmem:[#allocation4 + $0x18] sm:$0xff]
    %v1136 = vsel %vm221, %v1006, 0
    %1138 = vmatprep.subr.mxu0 0.0
    %1139 = vmatpush1.msra.mxu0 0.0
    %1140 = vmatprep.subr.mxu0 0.0
    %1141 = vmatpush1.msra.mxu0 0.0
    %1142 = vmatprep.subr.mxu0 0.0
    %1143 = vmatpush1.msra.mxu0 0.0
    %1144 = vmatprep.subr.mxu0 0.0
    %1145 = vmatpush1.msra.mxu0 0.0
    %1146 = vmatprep.subr.mxu0 0.0
    %1147 = vmatpush1.msra.mxu0 0.0
    %1148 = vmatprep.subr.mxu0 0.0
    %1149 = vmatpush1.msra.mxu0 0.0
    %1150 = vmatprep.subr.mxu0 0.0
    %1151 = vmatpush1.msra.mxu0 0.0
    %1152 = vmatprep.subr.mxu0 0.0
    %1153 = vmatpush1.msra.mxu0 0.0
    %1154 = vmatprep.subr.mxu0 0.0
    %1155 = vmatpush1.msra.mxu0 0.0
    %1156 = vmatprep.subr.mxu0 0.0
    %1157 = vmatpush1.msra.mxu0 0.0
    %1158 = vmatprep.subr.mxu0 0.0
    %1159 = vmatpush1.msra.mxu0 0.0
    %1160 = vmatprep.subr.mxu0 0.0
    %1161 = vmatpush1.msra.mxu0 0.0
    %1162 = vmatprep.subr.mxu0 0.0
    %1163 = vmatpush1.msra.mxu0 %v1135
    %1164 = vmatprep.subr.mxu0 0.0
    %1165 = vmatpush1.msra.mxu0 %v1134
    %1166 = vmatprep.subr.mxu0 0.0
    %1167 = vmatpush1.msra.mxu0 %v1133
    %1168 = vmatprep.subr.mxu0 0.0
    %1169 = vmatpush1.msra.mxu0 %v1132
    %1170 = vmatprep.subr.mxu0 0.0
    %1171 = vmatpush2.msra.mxu0 0.0
    %1172 = vmatprep.subr.mxu0 0.0
    %1173 = vmatpush2.msra.mxu0 0.0
    %1174 = vmatprep.subr.mxu0 0.0
    %1175 = vmatpush2.msra.mxu0 0.0
    %1176 = vmatprep.subr.mxu0 0.0
    %1177 = vmatpush2.msra.mxu0 0.0
    %1178 = vmatprep.subr.mxu0 0.0
    %1179 = vmatpush2.msra.mxu0 0.0
    %1180 = vmatprep.subr.mxu0 0.0
    %1181 = vmatpush2.msra.mxu0 0.0
    %1182 = vmatprep.subr.mxu0 0.0
    %1183 = vmatpush2.msra.mxu0 0.0
    %1184 = vmatprep.subr.mxu0 0.0
    %1185 = vmatpush2.msra.mxu0 0.0
    %1186 = vmatprep.subr.mxu0 0.0
    %1187 = vmatpush2.msra.mxu0 0.0
    %1188 = vmatprep.subr.mxu0 0.0
    %1189 = vmatpush2.msra.mxu0 0.0
    %1190 = vmatprep.subr.mxu0 0.0
    %1191 = vmatpush2.msra.mxu0 0.0
    %1192 = vmatprep.subr.mxu0 0.0
    %1193 = vmatpush2.msra.mxu0 0.0
    %1194 = vmatprep.subr.mxu0 0.0
    %1195 = vmatpush2.msra.mxu0 0.0
    %1196 = vmatprep.subr.mxu0 0.0
    %1197 = vmatpush2.msra.mxu0 0.0
    %1198 = vmatprep.subr.mxu0 0.0
    %1199 = vmatpush2.msra.mxu0 0.0
    %1200 = vmatprep.subr.mxu0 0.0
    %1201 = vmatpush2.msra.mxu0 0.0
    %1202 = vmatprep.mubr.f32.mxu0 0.0
    %1203 = vmatmul.mubr.f32.gmra.mxu0 %v1136
    %v1204 = vpop.f32.mrf.mxu0
    %v1205 = vadd.f32 0.0, %v1204
    %v1206 = vpop.f32.mrf.mxu0
    %1207 = vdwg.mxu0
    %v1208 = vadd.f32 %v1131, %v1205
    %v1209 = vxor.u32 %v1208, 2147483648
    %v1210 = vmul.f32 %v1209, 1.442695
    %v1211 = vpow.pop %v1210
    %v1212 = vadd.f32 %v1211, 1.0
    %v1213 = vrcp.pop %v1212
    %v1214 = vmul.f32 1.0, %v1213
    %v1215 = vtanh.pop %v1208
    %v1216 = vmul.f32 %v1214, %v997
    %1218 = vrot.lane.b32.xlu0 %v1215, 32
    %v1219 = vpop.permute.xlu0 %1218
    %v1221 = vmul.f32 %v1214, %v1219
    %1223 = vrot.lane.b32.xlu0 %v1221, 32
    %v1224 = vpop.permute.xlu0 %1223
    %v1226 = vadd.f32 %v1216, %v1224
    %v1227 = vtanh.pop %v1226
    %1229 = vrot.lane.b32.xlu0 %v1227, 32
    %v1230 = vpop.permute.xlu0 %1229
    %v1232 = vmul.f32 %v1214, %v1230
    %1234 = vrot.lane.b32.xlu0 %v1232, 64
    %v1235 = vpop.permute.xlu0 %1234
    %1237 = vrot.lane.b32.xlu0 %v1123, 96
    %v1238 = vpop.permute.xlu0 %1237
    %v1240 = vsel %vm221, %v1235, %v1238
    %v1241 = vld [vmem:[%s4] sm:$0xff]
    %v1242 = vld [vmem:[%s4 + $0x8] sm:$0xff]
    %v1243 = vld [vmem:[%s4 + $0x10] sm:$0xff]
    %v1244 = vld [vmem:[%s4 + $0x18] sm:$0xff]
    %v1245 = vld [vmem:[%s4 + $0x20] sm:$0xff]
    %v1246 = vld [vmem:[%s4 + $0x28] sm:$0xff]
    %v1247 = vld [vmem:[%s4 + $0x30] sm:$0xff]
    %v1248 = vld [vmem:[%s4 + $0x38] sm:$0xff]
    %v1249 = vld [vmem:[%s5] sm:$0x1]
    %v1251 = vlaneseq
    %v1252 = vshrl.u32 %v1251, 7
    %v1253 = vsub.s32 0, %v1252
    %v1254 = vrot.slane %v1249, %v1253
    %v1257 = vsel %vm340, %v1240, 0
    %1259 = vmatprep.subr.mxu0 0.0
    %1260 = vmatpush1.msra.mxu0 0.0
    %1261 = vmatprep.subr.mxu0 0.0
    %1262 = vmatpush1.msra.mxu0 0.0
    %1263 = vmatprep.subr.mxu0 0.0
    %1264 = vmatpush1.msra.mxu0 0.0
    %1265 = vmatprep.subr.mxu0 0.0
    %1266 = vmatpush1.msra.mxu0 0.0
    %1267 = vmatprep.subr.mxu0 0.0
    %1268 = vmatpush1.msra.mxu0 0.0
    %1269 = vmatprep.subr.mxu0 0.0
    %1270 = vmatpush1.msra.mxu0 0.0
    %1271 = vmatprep.subr.mxu0 0.0
    %1272 = vmatpush1.msra.mxu0 0.0
    %1273 = vmatprep.subr.mxu0 0.0
    %1274 = vmatpush1.msra.mxu0 0.0
    %1275 = vmatprep.subr.mxu0 0.0
    %1276 = vmatpush1.msra.mxu0 %v1248
    %1277 = vmatprep.subr.mxu0 0.0
    %1278 = vmatpush1.msra.mxu0 %v1247
    %1279 = vmatprep.subr.mxu0 0.0
    %1280 = vmatpush1.msra.mxu0 %v1246
    %1281 = vmatprep.subr.mxu0 0.0
    %1282 = vmatpush1.msra.mxu0 %v1245
    %1283 = vmatprep.subr.mxu0 0.0
    %1284 = vmatpush1.msra.mxu0 %v1244
    %1285 = vmatprep.subr.mxu0 0.0
    %1286 = vmatpush1.msra.mxu0 %v1243
    %1287 = vmatprep.subr.mxu0 0.0
    %1288 = vmatpush1.msra.mxu0 %v1242
    %1289 = vmatprep.subr.mxu0 0.0
    %1290 = vmatpush1.msra.mxu0 %v1241
    %1291 = vmatprep.subr.mxu0 0.0
    %1292 = vmatpush2.msra.mxu0 0.0
    %1293 = vmatprep.subr.mxu0 0.0
    %1294 = vmatpush2.msra.mxu0 0.0
    %1295 = vmatprep.subr.mxu0 0.0
    %1296 = vmatpush2.msra.mxu0 0.0
    %1297 = vmatprep.subr.mxu0 0.0
    %1298 = vmatpush2.msra.mxu0 0.0
    %1299 = vmatprep.subr.mxu0 0.0
    %1300 = vmatpush2.msra.mxu0 0.0
    %1301 = vmatprep.subr.mxu0 0.0
    %1302 = vmatpush2.msra.mxu0 0.0
    %1303 = vmatprep.subr.mxu0 0.0
    %1304 = vmatpush2.msra.mxu0 0.0
    %1305 = vmatprep.subr.mxu0 0.0
    %1306 = vmatpush2.msra.mxu0 0.0
    %1307 = vmatprep.subr.mxu0 0.0
    %1308 = vmatpush2.msra.mxu0 0.0
    %1309 = vmatprep.subr.mxu0 0.0
    %1310 = vmatpush2.msra.mxu0 0.0
    %1311 = vmatprep.subr.mxu0 0.0
    %1312 = vmatpush2.msra.mxu0 0.0
    %1313 = vmatprep.subr.mxu0 0.0
    %1314 = vmatpush2.msra.mxu0 0.0
    %1315 = vmatprep.subr.mxu0 0.0
    %1316 = vmatpush2.msra.mxu0 0.0
    %1317 = vmatprep.subr.mxu0 0.0
    %1318 = vmatpush2.msra.mxu0 0.0
    %1319 = vmatprep.subr.mxu0 0.0
    %1320 = vmatpush2.msra.mxu0 0.0
    %1321 = vmatprep.subr.mxu0 0.0
    %1322 = vmatpush2.msra.mxu0 0.0
    %1323 = vmatprep.mubr.f32.mxu0 0.0
    %1324 = vmatmul.mubr.f32.gmra.mxu0 %v1257
    %v1325 = vpop.f32.mrf.mxu0
    %v1326 = vadd.f32 %v1254, %v1325
    %v1327 = vpop.f32.mrf.mxu0
    %1328 = vdwg.mxu0
    %v1329 = vxor.u32 %v1326, 2147483648
    %v1330 = vmul.f32 %v1329, 1.442695
    %v1331 = vpow.pop %v1330
    %v1332 = vadd.f32 %v1331, 1.0
    %v1333 = vrcp.pop %v1332
    %v1334 = vmul.f32 1.0, %v1333
    %v1335 = vtanh.pop %v1326
    %v1336 = vmul.f32 %v1334, %v1117
    %1338 = vrot.lane.b32.xlu0 %v1335, 32
    %v1339 = vpop.permute.xlu0 %1338
    %v1341 = vmul.f32 %v1334, %v1339
    %1343 = vrot.lane.b32.xlu0 %v1341, 32
    %v1344 = vpop.permute.xlu0 %1343
    %v1346 = vadd.f32 %v1336, %v1344
    %v1347 = vtanh.pop %v1346
    %1349 = vrot.lane.b32.xlu0 %v1347, 32
    %v1350 = vpop.permute.xlu0 %1349
    %v1352 = vmul.f32 %v1334, %v1350
    %1354 = vrot.lane.b32.xlu0 %v1352, 64
    %v1355 = vpop.permute.xlu0 %1354
    %s1357 = scalar_lea.vmem [#allocation3], 32
    %1358 = vst.msk [vmem:[%s1357] sm:$0xff] %vm221, %v1355
    %s1359 = scalar_lea.vmem [#allocation2], 40
    %v1360 = vld [vmem:[%s1359] sm:$0xff]
    %v1361 = vld [vmem:[#allocation4] sm:$0xff]
    %v1362 = vld [vmem:[#allocation4 + $0x8] sm:$0xff]
    %v1363 = vld [vmem:[#allocation4 + $0x10] sm:$0xff]
    %v1364 = vld [vmem:[#allocation4 + $0x18] sm:$0xff]
    %v1365 = vsel %vm221, %v1235, 0
    %1367 = vmatprep.subr.mxu0 0.0
    %1368 = vmatpush1.msra.mxu0 0.0
    %1369 = vmatprep.subr.mxu0 0.0
    %1370 = vmatpush1.msra.mxu0 0.0
    %1371 = vmatprep.subr.mxu0 0.0
    %1372 = vmatpush1.msra.mxu0 0.0
    %1373 = vmatprep.subr.mxu0 0.0
    %1374 = vmatpush1.msra.mxu0 0.0
    %1375 = vmatprep.subr.mxu0 0.0
    %1376 = vmatpush1.msra.mxu0 0.0
    %1377 = vmatprep.subr.mxu0 0.0
    %1378 = vmatpush1.msra.mxu0 0.0
    %1379 = vmatprep.subr.mxu0 0.0
    %1380 = vmatpush1.msra.mxu0 0.0
    %1381 = vmatprep.subr.mxu0 0.0
    %1382 = vmatpush1.msra.mxu0 0.0
    %1383 = vmatprep.subr.mxu0 0.0
    %1384 = vmatpush1.msra.mxu0 0.0
    %1385 = vmatprep.subr.mxu0 0.0
    %1386 = vmatpush1.msra.mxu0 0.0
    %1387 = vmatprep.subr.mxu0 0.0
    %1388 = vmatpush1.msra.mxu0 0.0
    %1389 = vmatprep.subr.mxu0 0.0
    %1390 = vmatpush1.msra.mxu0 0.0
    %1391 = vmatprep.subr.mxu0 0.0
    %1392 = vmatpush1.msra.mxu0 %v1364
    %1393 = vmatprep.subr.mxu0 0.0
    %1394 = vmatpush1.msra.mxu0 %v1363
    %1395 = vmatprep.subr.mxu0 0.0
    %1396 = vmatpush1.msra.mxu0 %v1362
    %1397 = vmatprep.subr.mxu0 0.0
    %1398 = vmatpush1.msra.mxu0 %v1361
    %1399 = vmatprep.subr.mxu0 0.0
    %1400 = vmatpush2.msra.mxu0 0.0
    %1401 = vmatprep.subr.mxu0 0.0
    %1402 = vmatpush2.msra.mxu0 0.0
    %1403 = vmatprep.subr.mxu0 0.0
    %1404 = vmatpush2.msra.mxu0 0.0
    %1405 = vmatprep.subr.mxu0 0.0
    %1406 = vmatpush2.msra.mxu0 0.0
    %1407 = vmatprep.subr.mxu0 0.0
    %1408 = vmatpush2.msra.mxu0 0.0
    %1409 = vmatprep.subr.mxu0 0.0
    %1410 = vmatpush2.msra.mxu0 0.0
    %1411 = vmatprep.subr.mxu0 0.0
    %1412 = vmatpush2.msra.mxu0 0.0
    %1413 = vmatprep.subr.mxu0 0.0
    %1414 = vmatpush2.msra.mxu0 0.0
    %1415 = vmatprep.subr.mxu0 0.0
    %1416 = vmatpush2.msra.mxu0 0.0
    %1417 = vmatprep.subr.mxu0 0.0
    %1418 = vmatpush2.msra.mxu0 0.0
    %1419 = vmatprep.subr.mxu0 0.0
    %1420 = vmatpush2.msra.mxu0 0.0
    %1421 = vmatprep.subr.mxu0 0.0
    %1422 = vmatpush2.msra.mxu0 0.0
    %1423 = vmatprep.subr.mxu0 0.0
    %1424 = vmatpush2.msra.mxu0 0.0
    %1425 = vmatprep.subr.mxu0 0.0
    %1426 = vmatpush2.msra.mxu0 0.0
    %1427 = vmatprep.subr.mxu0 0.0
    %1428 = vmatpush2.msra.mxu0 0.0
    %1429 = vmatprep.subr.mxu0 0.0
    %1430 = vmatpush2.msra.mxu0 0.0
    %1431 = vmatprep.mubr.f32.mxu0 0.0
    %1432 = vmatmul.mubr.f32.gmra.mxu0 %v1365
    %v1433 = vpop.f32.mrf.mxu0
    %v1434 = vadd.f32 0.0, %v1433
    %v1435 = vpop.f32.mrf.mxu0
    %1436 = vdwg.mxu0
    %v1437 = vadd.f32 %v1360, %v1434
    %v1438 = vxor.u32 %v1437, 2147483648
    %v1439 = vmul.f32 %v1438, 1.442695
    %v1440 = vpow.pop %v1439
    %v1441 = vadd.f32 %v1440, 1.0
    %v1442 = vrcp.pop %v1441
    %v1443 = vmul.f32 1.0, %v1442
    %v1444 = vtanh.pop %v1437
    %v1445 = vmul.f32 %v1443, %v1226
    %1447 = vrot.lane.b32.xlu0 %v1444, 32
    %v1448 = vpop.permute.xlu0 %1447
    %v1450 = vmul.f32 %v1443, %v1448
    %1452 = vrot.lane.b32.xlu0 %v1450, 32
    %v1453 = vpop.permute.xlu0 %1452
    %v1455 = vadd.f32 %v1445, %v1453
    %v1456 = vtanh.pop %v1455
    %1458 = vrot.lane.b32.xlu0 %v1456, 32
    %v1459 = vpop.permute.xlu0 %1458
    %v1461 = vmul.f32 %v1443, %v1459
    %1463 = vrot.lane.b32.xlu0 %v1461, 64
    %v1464 = vpop.permute.xlu0 %1463
    %1466 = vrot.lane.b32.xlu0 %v1352, 96
    %v1467 = vpop.permute.xlu0 %1466
    %v1469 = vsel %vm221, %v1464, %v1467
    %v1470 = vld [vmem:[%s4] sm:$0xff]
    %v1471 = vld [vmem:[%s4 + $0x8] sm:$0xff]
    %v1472 = vld [vmem:[%s4 + $0x10] sm:$0xff]
    %v1473 = vld [vmem:[%s4 + $0x18] sm:$0xff]
    %v1474 = vld [vmem:[%s4 + $0x20] sm:$0xff]
    %v1475 = vld [vmem:[%s4 + $0x28] sm:$0xff]
    %v1476 = vld [vmem:[%s4 + $0x30] sm:$0xff]
    %v1477 = vld [vmem:[%s4 + $0x38] sm:$0xff]
    %v1478 = vld [vmem:[%s5] sm:$0x1]
    %v1480 = vlaneseq
    %v1481 = vshrl.u32 %v1480, 7
    %v1482 = vsub.s32 0, %v1481
    %v1483 = vrot.slane %v1478, %v1482
    %v1486 = vsel %vm340, %v1469, 0
    %1488 = vmatprep.subr.mxu0 0.0
    %1489 = vmatpush1.msra.mxu0 0.0
    %1490 = vmatprep.subr.mxu0 0.0
    %1491 = vmatpush1.msra.mxu0 0.0
    %1492 = vmatprep.subr.mxu0 0.0
    %1493 = vmatpush1.msra.mxu0 0.0
    %1494 = vmatprep.subr.mxu0 0.0
    %1495 = vmatpush1.msra.mxu0 0.0
    %1496 = vmatprep.subr.mxu0 0.0
    %1497 = vmatpush1.msra.mxu0 0.0
    %1498 = vmatprep.subr.mxu0 0.0
    %1499 = vmatpush1.msra.mxu0 0.0
    %1500 = vmatprep.subr.mxu0 0.0
    %1501 = vmatpush1.msra.mxu0 0.0
    %1502 = vmatprep.subr.mxu0 0.0
    %1503 = vmatpush1.msra.mxu0 0.0
    %1504 = vmatprep.subr.mxu0 0.0
    %1505 = vmatpush1.msra.mxu0 %v1477
    %1506 = vmatprep.subr.mxu0 0.0
    %1507 = vmatpush1.msra.mxu0 %v1476
    %1508 = vmatprep.subr.mxu0 0.0
    %1509 = vmatpush1.msra.mxu0 %v1475
    %1510 = vmatprep.subr.mxu0 0.0
    %1511 = vmatpush1.msra.mxu0 %v1474
    %1512 = vmatprep.subr.mxu0 0.0
    %1513 = vmatpush1.msra.mxu0 %v1473
    %1514 = vmatprep.subr.mxu0 0.0
    %1515 = vmatpush1.msra.mxu0 %v1472
    %1516 = vmatprep.subr.mxu0 0.0
    %1517 = vmatpush1.msra.mxu0 %v1471
    %1518 = vmatprep.subr.mxu0 0.0
    %1519 = vmatpush1.msra.mxu0 %v1470
    %1520 = vmatprep.subr.mxu0 0.0
    %1521 = vmatpush2.msra.mxu0 0.0
    %1522 = vmatprep.subr.mxu0 0.0
    %1523 = vmatpush2.msra.mxu0 0.0
    %1524 = vmatprep.subr.mxu0 0.0
    %1525 = vmatpush2.msra.mxu0 0.0
    %1526 = vmatprep.subr.mxu0 0.0
    %1527 = vmatpush2.msra.mxu0 0.0
    %1528 = vmatprep.subr.mxu0 0.0
    %1529 = vmatpush2.msra.mxu0 0.0
    %1530 = vmatprep.subr.mxu0 0.0
    %1531 = vmatpush2.msra.mxu0 0.0
    %1532 = vmatprep.subr.mxu0 0.0
    %1533 = vmatpush2.msra.mxu0 0.0
    %1534 = vmatprep.subr.mxu0 0.0
    %1535 = vmatpush2.msra.mxu0 0.0
    %1536 = vmatprep.subr.mxu0 0.0
    %1537 = vmatpush2.msra.mxu0 0.0
    %1538 = vmatprep.subr.mxu0 0.0
    %1539 = vmatpush2.msra.mxu0 0.0
    %1540 = vmatprep.subr.mxu0 0.0
    %1541 = vmatpush2.msra.mxu0 0.0
    %1542 = vmatprep.subr.mxu0 0.0
    %1543 = vmatpush2.msra.mxu0 0.0
    %1544 = vmatprep.subr.mxu0 0.0
    %1545 = vmatpush2.msra.mxu0 0.0
    %1546 = vmatprep.subr.mxu0 0.0
    %1547 = vmatpush2.msra.mxu0 0.0
    %1548 = vmatprep.subr.mxu0 0.0
    %1549 = vmatpush2.msra.mxu0 0.0
    %1550 = vmatprep.subr.mxu0 0.0
    %1551 = vmatpush2.msra.mxu0 0.0
    %1552 = vmatprep.mubr.f32.mxu0 0.0
    %1553 = vmatmul.mubr.f32.gmra.mxu0 %v1486
    %v1554 = vpop.f32.mrf.mxu0
    %v1555 = vadd.f32 %v1483, %v1554
    %v1556 = vpop.f32.mrf.mxu0
    %1557 = vdwg.mxu0
    %v1558 = vxor.u32 %v1555, 2147483648
    %v1559 = vmul.f32 %v1558, 1.442695
    %v1560 = vpow.pop %v1559
    %v1561 = vadd.f32 %v1560, 1.0
    %v1562 = vrcp.pop %v1561
    %v1563 = vmul.f32 1.0, %v1562
    %v1564 = vtanh.pop %v1555
    %v1565 = vmul.f32 %v1563, %v1346
    %1567 = vrot.lane.b32.xlu0 %v1564, 32
    %v1568 = vpop.permute.xlu0 %1567
    %v1570 = vmul.f32 %v1563, %v1568
    %1572 = vrot.lane.b32.xlu0 %v1570, 32
    %v1573 = vpop.permute.xlu0 %1572
    %v1575 = vadd.f32 %v1565, %v1573
    %v1576 = vtanh.pop %v1575
    %1578 = vrot.lane.b32.xlu0 %v1576, 32
    %v1579 = vpop.permute.xlu0 %1578
    %v1581 = vmul.f32 %v1563, %v1579
    %1583 = vrot.lane.b32.xlu0 %v1581, 64
    %v1584 = vpop.permute.xlu0 %1583
    %s1586 = scalar_lea.vmem [#allocation3], 40
    %1587 = vst.msk [vmem:[%s1586] sm:$0xff] %vm221, %v1584
    %s1588 = scalar_lea.vmem [#allocation2], 48
    %v1589 = vld [vmem:[%s1588] sm:$0xff]
    %v1590 = vld [vmem:[#allocation4] sm:$0xff]
    %v1591 = vld [vmem:[#allocation4 + $0x8] sm:$0xff]
    %v1592 = vld [vmem:[#allocation4 + $0x10] sm:$0xff]
    %v1593 = vld [vmem:[#allocation4 + $0x18] sm:$0xff]
    %v1594 = vsel %vm221, %v1464, 0
    %1596 = vmatprep.subr.mxu0 0.0
    %1597 = vmatpush1.msra.mxu0 0.0
    %1598 = vmatprep.subr.mxu0 0.0
    %1599 = vmatpush1.msra.mxu0 0.0
    %1600 = vmatprep.subr.mxu0 0.0
    %1601 = vmatpush1.msra.mxu0 0.0
    %1602 = vmatprep.subr.mxu0 0.0
    %1603 = vmatpush1.msra.mxu0 0.0
    %1604 = vmatprep.subr.mxu0 0.0
    %1605 = vmatpush1.msra.mxu0 0.0
    %1606 = vmatprep.subr.mxu0 0.0
    %1607 = vmatpush1.msra.mxu0 0.0
    %1608 = vmatprep.subr.mxu0 0.0
    %1609 = vmatpush1.msra.mxu0 0.0
    %1610 = vmatprep.subr.mxu0 0.0
    %1611 = vmatpush1.msra.mxu0 0.0
    %1612 = vmatprep.subr.mxu0 0.0
    %1613 = vmatpush1.msra.mxu0 0.0
    %1614 = vmatprep.subr.mxu0 0.0
    %1615 = vmatpush1.msra.mxu0 0.0
    %1616 = vmatprep.subr.mxu0 0.0
    %1617 = vmatpush1.msra.mxu0 0.0
    %1618 = vmatprep.subr.mxu0 0.0
    %1619 = vmatpush1.msra.mxu0 0.0
    %1620 = vmatprep.subr.mxu0 0.0
    %1621 = vmatpush1.msra.mxu0 %v1593
    %1622 = vmatprep.subr.mxu0 0.0
    %1623 = vmatpush1.msra.mxu0 %v1592
    %1624 = vmatprep.subr.mxu0 0.0
    %1625 = vmatpush1.msra.mxu0 %v1591
    %1626 = vmatprep.subr.mxu0 0.0
    %1627 = vmatpush1.msra.mxu0 %v1590
    %1628 = vmatprep.subr.mxu0 0.0
    %1629 = vmatpush2.msra.mxu0 0.0
    %1630 = vmatprep.subr.mxu0 0.0
    %1631 = vmatpush2.msra.mxu0 0.0
    %1632 = vmatprep.subr.mxu0 0.0
    %1633 = vmatpush2.msra.mxu0 0.0
    %1634 = vmatprep.subr.mxu0 0.0
    %1635 = vmatpush2.msra.mxu0 0.0
    %1636 = vmatprep.subr.mxu0 0.0
    %1637 = vmatpush2.msra.mxu0 0.0
    %1638 = vmatprep.subr.mxu0 0.0
    %1639 = vmatpush2.msra.mxu0 0.0
    %1640 = vmatprep.subr.mxu0 0.0
    %1641 = vmatpush2.msra.mxu0 0.0
    %1642 = vmatprep.subr.mxu0 0.0
    %1643 = vmatpush2.msra.mxu0 0.0
    %1644 = vmatprep.subr.mxu0 0.0
    %1645 = vmatpush2.msra.mxu0 0.0
    %1646 = vmatprep.subr.mxu0 0.0
    %1647 = vmatpush2.msra.mxu0 0.0
    %1648 = vmatprep.subr.mxu0 0.0
    %1649 = vmatpush2.msra.mxu0 0.0
    %1650 = vmatprep.subr.mxu0 0.0
    %1651 = vmatpush2.msra.mxu0 0.0
    %1652 = vmatprep.subr.mxu0 0.0
    %1653 = vmatpush2.msra.mxu0 0.0
    %1654 = vmatprep.subr.mxu0 0.0
    %1655 = vmatpush2.msra.mxu0 0.0
    %1656 = vmatprep.subr.mxu0 0.0
    %1657 = vmatpush2.msra.mxu0 0.0
    %1658 = vmatprep.subr.mxu0 0.0
    %1659 = vmatpush2.msra.mxu0 0.0
    %1660 = vmatprep.mubr.f32.mxu0 0.0
    %1661 = vmatmul.mubr.f32.gmra.mxu0 %v1594
    %v1662 = vpop.f32.mrf.mxu0
    %v1663 = vadd.f32 0.0, %v1662
    %v1664 = vpop.f32.mrf.mxu0
    %1665 = vdwg.mxu0
    %v1666 = vadd.f32 %v1589, %v1663
    %v1667 = vxor.u32 %v1666, 2147483648
    %v1668 = vmul.f32 %v1667, 1.442695
    %v1669 = vpow.pop %v1668
    %v1670 = vadd.f32 %v1669, 1.0
    %v1671 = vrcp.pop %v1670
    %v1672 = vmul.f32 1.0, %v1671
    %v1673 = vtanh.pop %v1666
    %v1674 = vmul.f32 %v1672, %v1455
    %1676 = vrot.lane.b32.xlu0 %v1673, 32
    %v1677 = vpop.permute.xlu0 %1676
    %v1679 = vmul.f32 %v1672, %v1677
    %1681 = vrot.lane.b32.xlu0 %v1679, 32
    %v1682 = vpop.permute.xlu0 %1681
    %v1684 = vadd.f32 %v1674, %v1682
    %v1685 = vtanh.pop %v1684
    %1687 = vrot.lane.b32.xlu0 %v1685, 32
    %v1688 = vpop.permute.xlu0 %1687
    %v1690 = vmul.f32 %v1672, %v1688
    %1692 = vrot.lane.b32.xlu0 %v1690, 64
    %v1693 = vpop.permute.xlu0 %1692
    %1695 = vrot.lane.b32.xlu0 %v1581, 96
    %v1696 = vpop.permute.xlu0 %1695
    %v1698 = vsel %vm221, %v1693, %v1696
    %v1699 = vld [vmem:[%s4] sm:$0xff]
    %v1700 = vld [vmem:[%s4 + $0x8] sm:$0xff]
    %v1701 = vld [vmem:[%s4 + $0x10] sm:$0xff]
    %v1702 = vld [vmem:[%s4 + $0x18] sm:$0xff]
    %v1703 = vld [vmem:[%s4 + $0x20] sm:$0xff]
    %v1704 = vld [vmem:[%s4 + $0x28] sm:$0xff]
    %v1705 = vld [vmem:[%s4 + $0x30] sm:$0xff]
    %v1706 = vld [vmem:[%s4 + $0x38] sm:$0xff]
    %v1707 = vld [vmem:[%s5] sm:$0x1]
    %v1709 = vlaneseq
    %v1710 = vshrl.u32 %v1709, 7
    %v1711 = vsub.s32 0, %v1710
    %v1712 = vrot.slane %v1707, %v1711
    %v1715 = vsel %vm340, %v1698, 0
    %1717 = vmatprep.subr.mxu0 0.0
    %1718 = vmatpush1.msra.mxu0 0.0
    %1719 = vmatprep.subr.mxu0 0.0
    %1720 = vmatpush1.msra.mxu0 0.0
    %1721 = vmatprep.subr.mxu0 0.0
    %1722 = vmatpush1.msra.mxu0 0.0
    %1723 = vmatprep.subr.mxu0 0.0
    %1724 = vmatpush1.msra.mxu0 0.0
    %1725 = vmatprep.subr.mxu0 0.0
    %1726 = vmatpush1.msra.mxu0 0.0
    %1727 = vmatprep.subr.mxu0 0.0
    %1728 = vmatpush1.msra.mxu0 0.0
    %1729 = vmatprep.subr.mxu0 0.0
    %1730 = vmatpush1.msra.mxu0 0.0
    %1731 = vmatprep.subr.mxu0 0.0
    %1732 = vmatpush1.msra.mxu0 0.0
    %1733 = vmatprep.subr.mxu0 0.0
    %1734 = vmatpush1.msra.mxu0 %v1706
    %1735 = vmatprep.subr.mxu0 0.0
    %1736 = vmatpush1.msra.mxu0 %v1705
    %1737 = vmatprep.subr.mxu0 0.0
    %1738 = vmatpush1.msra.mxu0 %v1704
    %1739 = vmatprep.subr.mxu0 0.0
    %1740 = vmatpush1.msra.mxu0 %v1703
    %1741 = vmatprep.subr.mxu0 0.0
    %1742 = vmatpush1.msra.mxu0 %v1702
    %1743 = vmatprep.subr.mxu0 0.0
    %1744 = vmatpush1.msra.mxu0 %v1701
    %1745 = vmatprep.subr.mxu0 0.0
    %1746 = vmatpush1.msra.mxu0 %v1700
    %1747 = vmatprep.subr.mxu0 0.0
    %1748 = vmatpush1.msra.mxu0 %v1699
    %1749 = vmatprep.subr.mxu0 0.0
    %1750 = vmatpush2.msra.mxu0 0.0
    %1751 = vmatprep.subr.mxu0 0.0
    %1752 = vmatpush2.msra.mxu0 0.0
    %1753 = vmatprep.subr.mxu0 0.0
    %1754 = vmatpush2.msra.mxu0 0.0
    %1755 = vmatprep.subr.mxu0 0.0
    %1756 = vmatpush2.msra.mxu0 0.0
    %1757 = vmatprep.subr.mxu0 0.0
    %1758 = vmatpush2.msra.mxu0 0.0
    %1759 = vmatprep.subr.mxu0 0.0
    %1760 = vmatpush2.msra.mxu0 0.0
    %1761 = vmatprep.subr.mxu0 0.0
    %1762 = vmatpush2.msra.mxu0 0.0
    %1763 = vmatprep.subr.mxu0 0.0
    %1764 = vmatpush2.msra.mxu0 0.0
    %1765 = vmatprep.subr.mxu0 0.0
    %1766 = vmatpush2.msra.mxu0 0.0
    %1767 = vmatprep.subr.mxu0 0.0
    %1768 = vmatpush2.msra.mxu0 0.0
    %1769 = vmatprep.subr.mxu0 0.0
    %1770 = vmatpush2.msra.mxu0 0.0
    %1771 = vmatprep.subr.mxu0 0.0
    %1772 = vmatpush2.msra.mxu0 0.0
    %1773 = vmatprep.subr.mxu0 0.0
    %1774 = vmatpush2.msra.mxu0 0.0
    %1775 = vmatprep.subr.mxu0 0.0
    %1776 = vmatpush2.msra.mxu0 0.0
    %1777 = vmatprep.subr.mxu0 0.0
    %1778 = vmatpush2.msra.mxu0 0.0
    %1779 = vmatprep.subr.mxu0 0.0
    %1780 = vmatpush2.msra.mxu0 0.0
    %1781 = vmatprep.mubr.f32.mxu0 0.0
    %1782 = vmatmul.mubr.f32.gmra.mxu0 %v1715
    %v1783 = vpop.f32.mrf.mxu0
    %v1784 = vadd.f32 %v1712, %v1783
    %v1785 = vpop.f32.mrf.mxu0
    %1786 = vdwg.mxu0
    %v1787 = vxor.u32 %v1784, 2147483648
    %v1788 = vmul.f32 %v1787, 1.442695
    %v1789 = vpow.pop %v1788
    %v1790 = vadd.f32 %v1789, 1.0
    %v1791 = vrcp.pop %v1790
    %v1792 = vmul.f32 1.0, %v1791
    %v1793 = vtanh.pop %v1784
    %v1794 = vmul.f32 %v1792, %v1575
    %1796 = vrot.lane.b32.xlu0 %v1793, 32
    %v1797 = vpop.permute.xlu0 %1796
    %v1799 = vmul.f32 %v1792, %v1797
    %1801 = vrot.lane.b32.xlu0 %v1799, 32
    %v1802 = vpop.permute.xlu0 %1801
    %v1804 = vadd.f32 %v1794, %v1802
    %v1805 = vtanh.pop %v1804
    %1807 = vrot.lane.b32.xlu0 %v1805, 32
    %v1808 = vpop.permute.xlu0 %1807
    %v1810 = vmul.f32 %v1792, %v1808
    %1812 = vrot.lane.b32.xlu0 %v1810, 64
    %v1813 = vpop.permute.xlu0 %1812
    %s1815 = scalar_lea.vmem [#allocation3], 48
    %1816 = vst.msk [vmem:[%s1815] sm:$0xff] %vm221, %v1813
    %s1817 = scalar_lea.vmem [#allocation2], 56
    %v1818 = vld [vmem:[%s1817] sm:$0xff]
    %v1819 = vld [vmem:[#allocation4] sm:$0xff]
    %v1820 = vld [vmem:[#allocation4 + $0x8] sm:$0xff]
    %v1821 = vld [vmem:[#allocation4 + $0x10] sm:$0xff]
    %v1822 = vld [vmem:[#allocation4 + $0x18] sm:$0xff]
    %v1823 = vsel %vm221, %v1693, 0
    %1825 = vmatprep.subr.mxu0 0.0
    %1826 = vmatpush1.msra.mxu0 0.0
    %1827 = vmatprep.subr.mxu0 0.0
    %1828 = vmatpush1.msra.mxu0 0.0
    %1829 = vmatprep.subr.mxu0 0.0
    %1830 = vmatpush1.msra.mxu0 0.0
    %1831 = vmatprep.subr.mxu0 0.0
    %1832 = vmatpush1.msra.mxu0 0.0
    %1833 = vmatprep.subr.mxu0 0.0
    %1834 = vmatpush1.msra.mxu0 0.0
    %1835 = vmatprep.subr.mxu0 0.0
    %1836 = vmatpush1.msra.mxu0 0.0
    %1837 = vmatprep.subr.mxu0 0.0
    %1838 = vmatpush1.msra.mxu0 0.0
    %1839 = vmatprep.subr.mxu0 0.0
    %1840 = vmatpush1.msra.mxu0 0.0
    %1841 = vmatprep.subr.mxu0 0.0
    %1842 = vmatpush1.msra.mxu0 0.0
    %1843 = vmatprep.subr.mxu0 0.0
    %1844 = vmatpush1.msra.mxu0 0.0
    %1845 = vmatprep.subr.mxu0 0.0
    %1846 = vmatpush1.msra.mxu0 0.0
    %1847 = vmatprep.subr.mxu0 0.0
    %1848 = vmatpush1.msra.mxu0 0.0
    %1849 = vmatprep.subr.mxu0 0.0
    %1850 = vmatpush1.msra.mxu0 %v1822
    %1851 = vmatprep.subr.mxu0 0.0
    %1852 = vmatpush1.msra.mxu0 %v1821
    %1853 = vmatprep.subr.mxu0 0.0
    %1854 = vmatpush1.msra.mxu0 %v1820
    %1855 = vmatprep.subr.mxu0 0.0
    %1856 = vmatpush1.msra.mxu0 %v1819
    %1857 = vmatprep.subr.mxu0 0.0
    %1858 = vmatpush2.msra.mxu0 0.0
    %1859 = vmatprep.subr.mxu0 0.0
    %1860 = vmatpush2.msra.mxu0 0.0
    %1861 = vmatprep.subr.mxu0 0.0
    %1862 = vmatpush2.msra.mxu0 0.0
    %1863 = vmatprep.subr.mxu0 0.0
    %1864 = vmatpush2.msra.mxu0 0.0
    %1865 = vmatprep.subr.mxu0 0.0
    %1866 = vmatpush2.msra.mxu0 0.0
    %1867 = vmatprep.subr.mxu0 0.0
    %1868 = vmatpush2.msra.mxu0 0.0
    %1869 = vmatprep.subr.mxu0 0.0
    %1870 = vmatpush2.msra.mxu0 0.0
    %1871 = vmatprep.subr.mxu0 0.0
    %1872 = vmatpush2.msra.mxu0 0.0
    %1873 = vmatprep.subr.mxu0 0.0
    %1874 = vmatpush2.msra.mxu0 0.0
    %1875 = vmatprep.subr.mxu0 0.0
    %1876 = vmatpush2.msra.mxu0 0.0
    %1877 = vmatprep.subr.mxu0 0.0
    %1878 = vmatpush2.msra.mxu0 0.0
    %1879 = vmatprep.subr.mxu0 0.0
    %1880 = vmatpush2.msra.mxu0 0.0
    %1881 = vmatprep.subr.mxu0 0.0
    %1882 = vmatpush2.msra.mxu0 0.0
    %1883 = vmatprep.subr.mxu0 0.0
    %1884 = vmatpush2.msra.mxu0 0.0
    %1885 = vmatprep.subr.mxu0 0.0
    %1886 = vmatpush2.msra.mxu0 0.0
    %1887 = vmatprep.subr.mxu0 0.0
    %1888 = vmatpush2.msra.mxu0 0.0
    %1889 = vmatprep.mubr.f32.mxu0 0.0
    %1890 = vmatmul.mubr.f32.gmra.mxu0 %v1823
    %v1891 = vpop.f32.mrf.mxu0
    %v1892 = vadd.f32 0.0, %v1891
    %v1893 = vpop.f32.mrf.mxu0
    %1894 = vdwg.mxu0
    %v1895 = vadd.f32 %v1818, %v1892
    %v1896 = vxor.u32 %v1895, 2147483648
    %v1897 = vmul.f32 %v1896, 1.442695
    %v1898 = vpow.pop %v1897
    %v1899 = vadd.f32 %v1898, 1.0
    %v1900 = vrcp.pop %v1899
    %v1901 = vmul.f32 1.0, %v1900
    %v1902 = vtanh.pop %v1895
    %v1903 = vmul.f32 %v1901, %v1684
    %1905 = vrot.lane.b32.xlu0 %v1902, 32
    %v1906 = vpop.permute.xlu0 %1905
    %v1908 = vmul.f32 %v1901, %v1906
    %1910 = vrot.lane.b32.xlu0 %v1908, 32
    %v1911 = vpop.permute.xlu0 %1910
    %v1913 = vadd.f32 %v1903, %v1911
    %v1914 = vtanh.pop %v1913
    %1916 = vrot.lane.b32.xlu0 %v1914, 32
    %v1917 = vpop.permute.xlu0 %1916
    %v1919 = vmul.f32 %v1901, %v1917
    %1921 = vrot.lane.b32.xlu0 %v1919, 64
    %v1922 = vpop.permute.xlu0 %1921
    %1924 = vrot.lane.b32.xlu0 %v1810, 96
    %v1925 = vpop.permute.xlu0 %1924
    %v1927 = vsel %vm221, %v1922, %v1925
    %v1928 = vld [vmem:[%s4] sm:$0xff]
    %v1929 = vld [vmem:[%s4 + $0x8] sm:$0xff]
    %v1930 = vld [vmem:[%s4 + $0x10] sm:$0xff]
    %v1931 = vld [vmem:[%s4 + $0x18] sm:$0xff]
    %v1932 = vld [vmem:[%s4 + $0x20] sm:$0xff]
    %v1933 = vld [vmem:[%s4 + $0x28] sm:$0xff]
    %v1934 = vld [vmem:[%s4 + $0x30] sm:$0xff]
    %v1935 = vld [vmem:[%s4 + $0x38] sm:$0xff]
    %v1936 = vld [vmem:[%s5] sm:$0x1]
    %v1938 = vlaneseq
    %v1939 = vshrl.u32 %v1938, 7
    %v1940 = vsub.s32 0, %v1939
    %v1941 = vrot.slane %v1936, %v1940
    %v1944 = vsel %vm340, %v1927, 0
    %1946 = vmatprep.subr.mxu0 0.0
    %1947 = vmatpush1.msra.mxu0 0.0
    %1948 = vmatprep.subr.mxu0 0.0
    %1949 = vmatpush1.msra.mxu0 0.0
    %1950 = vmatprep.subr.mxu0 0.0
    %1951 = vmatpush1.msra.mxu0 0.0
    %1952 = vmatprep.subr.mxu0 0.0
    %1953 = vmatpush1.msra.mxu0 0.0
    %1954 = vmatprep.subr.mxu0 0.0
    %1955 = vmatpush1.msra.mxu0 0.0
    %1956 = vmatprep.subr.mxu0 0.0
    %1957 = vmatpush1.msra.mxu0 0.0
    %1958 = vmatprep.subr.mxu0 0.0
    %1959 = vmatpush1.msra.mxu0 0.0
    %1960 = vmatprep.subr.mxu0 0.0
    %1961 = vmatpush1.msra.mxu0 0.0
    %1962 = vmatprep.subr.mxu0 0.0
    %1963 = vmatpush1.msra.mxu0 %v1935
    %1964 = vmatprep.subr.mxu0 0.0
    %1965 = vmatpush1.msra.mxu0 %v1934
    %1966 = vmatprep.subr.mxu0 0.0
    %1967 = vmatpush1.msra.mxu0 %v1933
    %1968 = vmatprep.subr.mxu0 0.0
    %1969 = vmatpush1.msra.mxu0 %v1932
    %1970 = vmatprep.subr.mxu0 0.0
    %1971 = vmatpush1.msra.mxu0 %v1931
    %1972 = vmatprep.subr.mxu0 0.0
    %1973 = vmatpush1.msra.mxu0 %v1930
    %1974 = vmatprep.subr.mxu0 0.0
    %1975 = vmatpush1.msra.mxu0 %v1929
    %1976 = vmatprep.subr.mxu0 0.0
    %1977 = vmatpush1.msra.mxu0 %v1928
    %1978 = vmatprep.subr.mxu0 0.0
    %1979 = vmatpush2.msra.mxu0 0.0
    %1980 = vmatprep.subr.mxu0 0.0
    %1981 = vmatpush2.msra.mxu0 0.0
    %1982 = vmatprep.subr.mxu0 0.0
    %1983 = vmatpush2.msra.mxu0 0.0
    %1984 = vmatprep.subr.mxu0 0.0
    %1985 = vmatpush2.msra.mxu0 0.0
    %1986 = vmatprep.subr.mxu0 0.0
    %1987 = vmatpush2.msra.mxu0 0.0
    %1988 = vmatprep.subr.mxu0 0.0
    %1989 = vmatpush2.msra.mxu0 0.0
    %1990 = vmatprep.subr.mxu0 0.0
    %1991 = vmatpush2.msra.mxu0 0.0
    %1992 = vmatprep.subr.mxu0 0.0
    %1993 = vmatpush2.msra.mxu0 0.0
    %1994 = vmatprep.subr.mxu0 0.0
    %1995 = vmatpush2.msra.mxu0 0.0
    %1996 = vmatprep.subr.mxu0 0.0
    %1997 = vmatpush2.msra.mxu0 0.0
    %1998 = vmatprep.subr.mxu0 0.0
    %1999 = vmatpush2.msra.mxu0 0.0
    %2000 = vmatprep.subr.mxu0 0.0
    %2001 = vmatpush2.msra.mxu0 0.0
    %2002 = vmatprep.subr.mxu0 0.0
    %2003 = vmatpush2.msra.mxu0 0.0
    %2004 = vmatprep.subr.mxu0 0.0
    %2005 = vmatpush2.msra.mxu0 0.0
    %2006 = vmatprep.subr.mxu0 0.0
    %2007 = vmatpush2.msra.mxu0 0.0
    %2008 = vmatprep.subr.mxu0 0.0
    %2009 = vmatpush2.msra.mxu0 0.0
    %2010 = vmatprep.mubr.f32.mxu0 0.0
    %2011 = vmatmul.mubr.f32.gmra.mxu0 %v1944
    %v2012 = vpop.f32.mrf.mxu0
    %v2013 = vadd.f32 %v1941, %v2012
    %v2014 = vpop.f32.mrf.mxu0
    %2015 = vdwg.mxu0
    %v2016 = vxor.u32 %v2013, 2147483648
    %v2017 = vmul.f32 %v2016, 1.442695
    %v2018 = vpow.pop %v2017
    %v2019 = vadd.f32 %v2018, 1.0
    %v2020 = vrcp.pop %v2019
    %v2021 = vmul.f32 1.0, %v2020
    %v2022 = vtanh.pop %v2013
    %v2023 = vmul.f32 %v2021, %v1804
    %2025 = vrot.lane.b32.xlu0 %v2022, 32
    %v2026 = vpop.permute.xlu0 %2025
    %v2028 = vmul.f32 %v2021, %v2026
    %2030 = vrot.lane.b32.xlu0 %v2028, 32
    %v2031 = vpop.permute.xlu0 %2030
    %v2033 = vadd.f32 %v2023, %v2031
    %v2034 = vtanh.pop %v2033
    %2036 = vrot.lane.b32.xlu0 %v2034, 32
    %v2037 = vpop.permute.xlu0 %2036
    %v2039 = vmul.f32 %v2021, %v2037
    %2041 = vrot.lane.b32.xlu0 %v2039, 64
    %v2042 = vpop.permute.xlu0 %2041
    %2044 = vst.msk [vmem:[#allocation3 + $0x38] sm:$0xff] %vm221, %v2042
    %v2045 = vld [vmem:[#allocation3] sm:$0xff]
    %v2046 = vld [vmem:[#allocation3 + $0x8] sm:$0xff]
    %v2047 = vld [vmem:[#allocation3 + $0x10] sm:$0xff]
    %v2048 = vld [vmem:[#allocation3 + $0x18] sm:$0xff]
    %v2049 = vld [vmem:[#allocation3 + $0x20] sm:$0xff]
    %v2050 = vld [vmem:[#allocation3 + $0x28] sm:$0xff]
    %v2051 = vld [vmem:[#allocation3 + $0x30] sm:$0xff]
    %v2052 = vld [vmem:[#allocation3 + $0x38] sm:$0xff]
    %v2053 = vld [vmem:[#allocation7] sm:$0xff]
    %v2054 = vld [vmem:[#allocation7 + $0x8] sm:$0xff]
    %v2055 = vld [vmem:[#allocation7 + $0x10] sm:$0xff]
    %v2056 = vld [vmem:[#allocation7 + $0x18] sm:$0xff]
    %v2057 = vld [vmem:[%s7] sm:$0x1]
    %v2059 = vlaneseq
    %v2060 = vshrl.u32 %v2059, 7
    %v2061 = vsub.s32 0, %v2060
    %v2062 = vrot.slane %v2057, %v2061
    %v2065 = vsel %vm221, %v2045, 0
    %v2068 = vsel %vm221, %v2046, 0
    %v2071 = vsel %vm221, %v2047, 0
    %v2074 = vsel %vm221, %v2048, 0
    %v2077 = vsel %vm221, %v2049, 0
    %v2080 = vsel %vm221, %v2050, 0
    %v2083 = vsel %vm221, %v2051, 0
    %v2086 = vsel %vm221, %v2052, 0
    %2088 = vmatprep.subr.mxu0 0.0
    %2089 = vmatpush1.msra.mxu0 0.0
    %2090 = vmatprep.subr.mxu0 0.0
    %2091 = vmatpush1.msra.mxu0 0.0
    %2092 = vmatprep.subr.mxu0 0.0
    %2093 = vmatpush1.msra.mxu0 0.0
    %2094 = vmatprep.subr.mxu0 0.0
    %2095 = vmatpush1.msra.mxu0 0.0
    %2096 = vmatprep.subr.mxu0 0.0
    %2097 = vmatpush1.msra.mxu0 0.0
    %2098 = vmatprep.subr.mxu0 0.0
    %2099 = vmatpush1.msra.mxu0 0.0
    %2100 = vmatprep.subr.mxu0 0.0
    %2101 = vmatpush1.msra.mxu0 0.0
    %2102 = vmatprep.subr.mxu0 0.0
    %2103 = vmatpush1.msra.mxu0 0.0
    %2104 = vmatprep.subr.mxu0 0.0
    %2105 = vmatpush1.msra.mxu0 0.0
    %2106 = vmatprep.subr.mxu0 0.0
    %2107 = vmatpush1.msra.mxu0 0.0
    %2108 = vmatprep.subr.mxu0 0.0
    %2109 = vmatpush1.msra.mxu0 0.0
    %2110 = vmatprep.subr.mxu0 0.0
    %2111 = vmatpush1.msra.mxu0 0.0
    %2112 = vmatprep.subr.mxu0 0.0
    %2113 = vmatpush1.msra.mxu0 %v2056
    %2114 = vmatprep.subr.mxu0 0.0
    %2115 = vmatpush1.msra.mxu0 %v2055
    %2116 = vmatprep.subr.mxu0 0.0
    %2117 = vmatpush1.msra.mxu0 %v2054
    %2118 = vmatprep.subr.mxu0 0.0
    %2119 = vmatpush1.msra.mxu0 %v2053
    %2120 = vmatprep.subr.mxu0 0.0
    %2121 = vmatpush2.msra.mxu0 0.0
    %2122 = vmatprep.subr.mxu0 0.0
    %2123 = vmatpush2.msra.mxu0 0.0
    %2124 = vmatprep.subr.mxu0 0.0
    %2125 = vmatpush2.msra.mxu0 0.0
    %2126 = vmatprep.subr.mxu0 0.0
    %2127 = vmatpush2.msra.mxu0 0.0
    %2128 = vmatprep.subr.mxu0 0.0
    %2129 = vmatpush2.msra.mxu0 0.0
    %2130 = vmatprep.subr.mxu0 0.0
    %2131 = vmatpush2.msra.mxu0 0.0
    %2132 = vmatprep.subr.mxu0 0.0
    %2133 = vmatpush2.msra.mxu0 0.0
    %2134 = vmatprep.subr.mxu0 0.0
    %2135 = vmatpush2.msra.mxu0 0.0
    %2136 = vmatprep.subr.mxu0 0.0
    %2137 = vmatpush2.msra.mxu0 0.0
    %2138 = vmatprep.subr.mxu0 0.0
    %2139 = vmatpush2.msra.mxu0 0.0
    %2140 = vmatprep.subr.mxu0 0.0
    %2141 = vmatpush2.msra.mxu0 0.0
    %2142 = vmatprep.subr.mxu0 0.0
    %2143 = vmatpush2.msra.mxu0 0.0
    %2144 = vmatprep.subr.mxu0 0.0
    %2145 = vmatpush2.msra.mxu0 0.0
    %2146 = vmatprep.subr.mxu0 0.0
    %2147 = vmatpush2.msra.mxu0 0.0
    %2148 = vmatprep.subr.mxu0 0.0
    %2149 = vmatpush2.msra.mxu0 0.0
    %2150 = vmatprep.subr.mxu0 0.0
    %2151 = vmatpush2.msra.mxu0 0.0
    %2152 = vmatprep.mubr.f32.mxu0 0.0
    %2153 = vmatmul.mubr.f32.gmra.mxu0 %v2065
    %v2154 = vpop.f32.mrf.mxu0
    %v2155 = vadd.f32 %v2062, %v2154
    %v2156 = vpop.f32.mrf.mxu0
    %2157 = vmatprep.mubr.f32.mxu0 0.0
    %2158 = vmatmul.mubr.f32.gmra.mxu0 %v2068
    %v2159 = vpop.f32.mrf.mxu0
    %v2160 = vadd.f32 %v2062, %v2159
    %v2161 = vpop.f32.mrf.mxu0
    %2162 = vmatprep.mubr.f32.mxu0 0.0
    %2163 = vmatmul.mubr.f32.gmra.mxu0 %v2071
    %v2164 = vpop.f32.mrf.mxu0
    %v2165 = vadd.f32 %v2062, %v2164
    %v2166 = vpop.f32.mrf.mxu0
    %2167 = vmatprep.mubr.f32.mxu0 0.0
    %2168 = vmatmul.mubr.f32.gmra.mxu0 %v2074
    %v2169 = vpop.f32.mrf.mxu0
    %v2170 = vadd.f32 %v2062, %v2169
    %v2171 = vpop.f32.mrf.mxu0
    %2172 = vmatprep.mubr.f32.mxu0 0.0
    %2173 = vmatmul.mubr.f32.gmra.mxu0 %v2077
    %v2174 = vpop.f32.mrf.mxu0
    %v2175 = vadd.f32 %v2062, %v2174
    %v2176 = vpop.f32.mrf.mxu0
    %2177 = vmatprep.mubr.f32.mxu0 0.0
    %2178 = vmatmul.mubr.f32.gmra.mxu0 %v2080
    %v2179 = vpop.f32.mrf.mxu0
    %v2180 = vadd.f32 %v2062, %v2179
    %v2181 = vpop.f32.mrf.mxu0
    %2182 = vmatprep.mubr.f32.mxu0 0.0
    %2183 = vmatmul.mubr.f32.gmra.mxu0 %v2083
    %v2184 = vpop.f32.mrf.mxu0
    %v2185 = vadd.f32 %v2062, %v2184
    %v2186 = vpop.f32.mrf.mxu0
    %2187 = vmatprep.mubr.f32.mxu0 0.0
    %2188 = vmatmul.mubr.f32.gmra.mxu0 %v2086
    %v2189 = vpop.f32.mrf.mxu0
    %v2190 = vadd.f32 %v2062, %v2189
    %v2191 = vpop.f32.mrf.mxu0
    %2192 = vdwg.mxu0
    %2193 = vst [vmem:[#allocation9] sm:$0xff] %v2155
    %2194 = vst [vmem:[#allocation9 + $0x8] sm:$0xff] %v2160
    %2195 = vst [vmem:[#allocation9 + $0x10] sm:$0xff] %v2165
    %2196 = vst [vmem:[#allocation9 + $0x18] sm:$0xff] %v2170
    %2197 = vst [vmem:[#allocation9 + $0x20] sm:$0xff] %v2175
    %2198 = vst [vmem:[#allocation9 + $0x28] sm:$0xff] %v2180
    %2199 = vst [vmem:[#allocation9 + $0x30] sm:$0xff] %v2185
    %2200 = vst [vmem:[#allocation9 + $0x38] sm:$0xff] %v2190
    // Predicated region
    $region42: #{tpu_custom_call.1} parent=1 // pred_check
      _
    $region43: #{tpu_custom_call.1} parent=1 // pred_check_branch
      %2202 = sbr.rel (0) target = $region45
    $region44: #{tpu_custom_call.1} parent=1 // pred_region
      %s2204 = ssub.s32 1024, 1024
      %2205 = vsyncadd [#allocation6], %s2204
      %s2206 = sshll.u32 [#allocation9], 4
      %s2207 = int_to_ptr.vmem [resolvable:$true] %s2206
      %2212 = dma.vmem_to_hbm [thread:$0]  %s2207, 1024, %s8, [#allocation6], 128, 128, 8
    $region45: #{tpu_custom_call.1} parent=1 // pred_fallthru
      _
    // Predicated region
    $region46: #{tpu_custom_call.1} parent=1 // pred_check
      _
    $region47: #{tpu_custom_call.1} parent=1 // pred_check_branch
      %2214 = sbr.rel (0) target = $region49
    $region48: #{tpu_custom_call.1} parent=1 // pred_region
      %2215 = dma.done [#allocation6], 1024
    $region49: #{tpu_custom_call.1} parent=1 // pred_fallthru
      _
    %2216 = vsyncpa [#allocation5], 1
    %2217 = vsyncpa [#allocation8], 1
    %2218 = vsyncpa [#allocation6], 1

</llo_original>
